<compile_context>
chip_gen: v7x
topology: tpu7x:2x2x1
jax: 0.10.0
libtpu: 0.0.40
codegen_flags: <defaults>
</compile_context>

<pallas_src>
import functools

import jax
import jax.numpy as jnp
from jax.experimental import pallas as pl
from jax.experimental.pallas import tpu as pltpu

_LANE = 128


def _round_up(x, m):
    return ((x + m - 1) // m) * m


def _vmem_limit_bytes():
    """Generation-aware VMEM budget (v7x only has 64 MiB per TensorCore)."""
    try:
        cap = pltpu.get_tpu_info().vmem_capacity_bytes
        return int(min(cap * 0.55, 100 * 1024 * 1024))
    except Exception:
        return 48 * 1024 * 1024


_VMEM_LIMIT = _vmem_limit_bytes()


# ---------------------------------------------------------------------------
# Kernels
# ---------------------------------------------------------------------------
def _cv1_kernel(x_ref, w_ref, b_ref, z_ref, *, precision):
    """cv1: 1x1 conv + folded BN as a matmul over channels.  grid=(B, n_tiles)."""
    z = jnp.dot(x_ref[...], w_ref[...], preferred_element_type=jnp.float32,
                precision=precision) + b_ref[...]
    z_ref[...] = z.astype(z_ref.dtype)


def _cv2_fused_kernel(z1_ref, pp1_ref, a1w1_ref, a1b1_ref, a1w2_ref, a1b2_ref,
                      w2_ref, b2_ref,
                      pp2_ref, a2w1_ref, a2b1_ref, a2w2_ref, a2b2_ref,
                      x1_ref, ssum_ref, smax_ref, pad_ref,
                      *, H, W, R, precision):
    """MetaAconC(z1) -> 3x3 conv + folded BN -> MetaAconC -> CA avg/max pooling.

    grid=(B,).  z1_ref (HW, Cm); x1_ref (HW, C2) output (also used to stage z2);
    ssum/smax (1, C2) f32; pad_ref row-padded flat scratch (HW + 2W + 2, Cm).
    """
    f32 = jnp.float32
    HW = H * W
    RW = R * W
    n_chunks = H // R
    Cm = pad_ref.shape[-1]
    C2 = x1_ref.shape[-1]
    pad_rows = HW + 2 * W + 2

    # Halo-only zeroing: the interior HW rows are fully overwritten below.
    pad_ref[0:W + 1, :] = jnp.zeros((W + 1, Cm), pad_ref.dtype)
    pad_ref[pad_rows - (W + 1):pad_rows, :] = jnp.zeros((W + 1, Cm), pad_ref.dtype)

    # ---- MetaAconC #1 beta from the spatial mean of z1 (tiny in-kernel MLP) --
    def _sum_z1(t, s):
        zc = z1_ref[pl.ds(t * RW, RW), :].astype(f32)
        return s + jnp.sum(zc, axis=0, keepdims=True)

    m1 = jax.lax.fori_loop(0, n_chunks, _sum_z1,
                           jnp.zeros((1, Cm), f32)) * (1.0 / HW)
    h1 = jnp.dot(m1, a1w1_ref[...], preferred_element_type=f32,
                 precision=precision) + a1b1_ref[...]
    beta1 = jax.nn.sigmoid(jnp.dot(h1, a1w2_ref[...], preferred_element_type=f32,
                                   precision=precision) + a1b2_ref[...])
    p2_1 = pp1_ref[1:2, :]
    dp_1 = pp1_ref[0:1, :] - p2_1

    # ---- pass 0: a1 = MetaAconC(z1) -> padded scratch (chunked, bf16) --------
    def _pass0(t, carry):
        z = z1_ref[pl.ds(t * RW, RW), :].astype(f32)
        dpx = dp_1 * z
        a1 = dpx * jax.nn.sigmoid(beta1 * dpx) + p2_1 * z
        pad_ref[pl.ds(W + 1 + t * RW, RW), :] = a1.astype(pad_ref.dtype)
        return carry

    jax.lax.fori_loop(0, n_chunks, _pass0, 0)

    # ---- pass 1: 3x3 conv + folded BN (chunked); z2 staged in the out block --
    col = jax.lax.broadcasted_iota(jnp.int32, (RW, 1), 0) % W
    not_left = col >= 1            # dx == 0 tap invalid at w == 0
    not_right = col <= W - 2       # dx == 2 tap invalid at w == W-1

    def _pass1(t, s2):
        base = t * RW
        acc = jnp.zeros((RW, C2), f32)
        # TODO(synk): fuse the 3 dx taps into one K=3*Cm matmul for better MXU fill.
        for dy in range(3):
            for dx in range(3):
                win = pad_ref[pl.ds(base + dy * W + dx, RW), :]
                if dx == 0:
                    win = jnp.where(not_left, win, 0)
                elif dx == 2:
                    win = jnp.where(not_right, win, 0)
                acc = acc + jnp.dot(win, w2_ref[dy * 3 + dx],
                                    preferred_element_type=f32,
                                    precision=precision)
        z2 = acc + b2_ref[...]
        x1_ref[pl.ds(base, RW), :] = z2.astype(x1_ref.dtype)
        return s2 + jnp.sum(z2, axis=0, keepdims=True)

    s2 = jax.lax.fori_loop(0, n_chunks, _pass1, jnp.zeros((1, C2), f32))

    # ---- MetaAconC #2 beta ----------------------------------------------------
    m2 = s2 * (1.0 / HW)
    h2 = jnp.dot(m2, a2w1_ref[...], preferred_element_type=f32,
                 precision=precision) + a2b1_ref[...]
    beta2 = jax.nn.sigmoid(jnp.dot(h2, a2w2_ref[...], preferred_element_type=f32,
                                   precision=precision) + a2b2_ref[...])
    p2_2 = pp2_ref[1:2, :]
    dp_2 = pp2_ref[0:1, :] - p2_2

    # ---- pass 2: x1 = MetaAconC(z2); channel-attention avg/max pooling -------
    def _pass2(t, carry):
        ssum, smax = carry
        z = x1_ref[pl.ds(t * RW, RW), :].astype(f32)
        dpx = dp_2 * z
        x1 = dpx * jax.nn.sigmoid(beta2 * dpx) + p2_2 * z
        x1_ref[pl.ds(t * RW, RW), :] = x1.astype(x1_ref.dtype)
        ssum = ssum + jnp.sum(x1, axis=0, keepdims=True)
        smax = jnp.maximum(smax, jnp.max(x1, axis=0, keepdims=True))
        return ssum, smax

    ssum, smax = jax.lax.fori_loop(
        0, n_chunks, _pass2,
        (jnp.zeros((1, C2), f32), jnp.full((1, C2), -jnp.inf, f32)))
    ssum_ref[...] = ssum
    smax_ref[...] = smax


def _attention_kernel(*refs, H, W, ksize, c2_real, add):
    """Channel scale * x1, 7x7 spatial attention, final scale, optional residual.
    grid=(B,)."""
    if add:
        x1_ref, ca_ref, wsa_ref, xres_ref, o_ref, map_ref = refs
    else:
        x1_ref, ca_ref, wsa_ref, o_ref, map_ref = refs
        xres_ref = None
    f32 = jnp.float32
    p = (ksize - 1) // 2

    out1 = x1_ref[...].astype(f32) * ca_ref[...]               # (H, W, C2p)
    real = out1[:, :, :c2_real]                                # exclude lane padding
    avg_c = jnp.mean(real, axis=-1, keepdims=True)             # (H, W, 1)
    max_c = jnp.max(real, axis=-1, keepdims=True)              # (H, W, 1)

    # Packed [avg, max] padded map.  Whole-scratch zero is cheap here: the
    # channel dimension is already collapsed (2 lanes).
    map_ref[...] = jnp.zeros(map_ref.shape, map_ref.dtype)
    map_ref[p:p + H, p:p + W, 0:1] = avg_c
    map_ref[p:p + H, p:p + W, 1:2] = max_c

    # TODO(synk): lane-dense (H, W) map layout (needs an (H,W,1)<->(H,W) relayout);
    # the packed 2-lane map below already halves the tap-loop cost.
    acc = jnp.zeros((H, W, 2), f32)
    for ky in range(ksize):
        for kx in range(ksize):
            idx = ky * ksize + kx
            wpair = wsa_ref[idx:idx + 1, :]                    # (1, 2) [w_avg, w_max]
            acc = acc + map_ref[ky:ky + H, kx:kx + W, :] * wpair
    sa = jax.nn.sigmoid(acc[:, :, 0:1] + acc[:, :, 1:2])       # (H, W, 1)

    out = out1 * sa
    if add:
        out = out + xres_ref[...].astype(f32)
    o_ref[...] = out.astype(o_ref.dtype)


# ---------------------------------------------------------------------------
# Wrapper
# ---------------------------------------------------------------------------
def _fold_bn(w_oihw, bn, eps=1e-5):
    gamma, beta, mean, var = bn
    scale = gamma / jnp.sqrt(var + eps)
    return w_oihw * scale[:, None, None, None], beta - mean * scale


def _acon_kernel_params(p, c, cp):
    """MetaAconC params (p1/p2 + fc1/fc2) laid out for in-kernel use, lane-padded."""
    m = p["fc1_w"].shape[0]
    pp = jnp.zeros((2, cp), jnp.float32)
    pp = pp.at[0, :c].set(p["p1"]).at[1, :c].set(p["p2"])
    w1t = jnp.zeros((cp, m), jnp.float32).at[:c, :].set(p["fc1_w"].T)
    b1 = p["fc1_b"].reshape(1, m).astype(jnp.float32)
    w2t = jnp.zeros((m, cp), jnp.float32).at[:, :c].set(p["fc2_w"].T)
    b2 = jnp.zeros((1, cp), jnp.float32).at[0, :c].set(p["fc2_b"])
    return pp, w1t, b1, w2t, b2


def _pick_chunk_rows(H, W, target=512):
    best = 1
    for r in range(1, H + 1):
        if H % r == 0 and r * W <= target:
            best = r
    return best


def cbam_bottleneck_forward(x, params, *, precision=None):
    """CBAMBottleneck forward.  x: (B, H, W, C1) NHWC.

    Production path: feed bf16 `x` with precision=None (single-pass bf16 MXU,
    bf16 slabs, f32 accumulation).  precision=HIGHEST + f32 x is only for
    numerics verification.
    """
    B, H, W, C1 = x.shape
    dt = x.dtype
    HW = H * W
    ksize, add, g = params["ksize"], params["add"], params["g"]
    if g != 1:
        # TODO(synk): grouped 3x3 conv (g > 1) not implemented.
        raise NotImplementedError("grouped cv2 (g > 1) not implemented")

    # ---- fold BN, transpose + lane-pad the conv weights (parameter-sized) ----
    w1f, b1f = _fold_bn(params["cv1_w"], params["cv1_bn"])
    w2f, b2f = _fold_bn(params["cv2_w"], params["cv2_bn"])
    Cm, C2 = w1f.shape[0], w2f.shape[0]
    Cmp, C2p = _round_up(Cm, _LANE), _round_up(C2, _LANE)

    w1_k = jnp.zeros((C1, Cmp), jnp.float32).at[:, :Cm].set(
        jnp.transpose(w1f[:, :, 0, 0], (1, 0))).astype(dt)
    b1_k = jnp.zeros((1, Cmp), jnp.float32).at[0, :Cm].set(b1f)
    w2_k = jnp.zeros((9, Cmp, C2p), jnp.float32).at[:, :Cm, :C2].set(
        jnp.transpose(w2f, (2, 3, 1, 0)).reshape(9, Cm, C2)).astype(dt)
    b2_k = jnp.zeros((1, C2p), jnp.float32).at[0, :C2].set(b2f)

    acon1 = _acon_kernel_params(params["cv1_act"], Cm, Cmp)
    acon2 = _acon_kernel_params(params["cv2_act"], C2, C2p)

    xf = x.reshape(B, HW, C1)
    tile = min(HW, 1024)
    n_t = pl.cdiv(HW, tile)

    # ---- stage 1: cv1 (1x1 conv + folded BN), lane-dense z1 slab --------------
    z1f = pl.pallas_call(
        functools.partial(_cv1_kernel, precision=precision),
        out_shape=jax.ShapeDtypeStruct((B, HW, Cmp), dt),
        grid=(B, n_t),
        in_specs=[pl.BlockSpec((None, tile, C1), lambda b, j: (b, j, 0)),
                  pl.BlockSpec((C1, Cmp), lambda b, j: (0, 0)),
                  pl.BlockSpec((1, Cmp), lambda b, j: (0, 0))],
        out_specs=pl.BlockSpec((None, tile, Cmp), lambda b, j: (b, j, 0)),
        compiler_params=pltpu.CompilerParams(
            dimension_semantics=("parallel", "parallel"),
            vmem_limit_bytes=_VMEM_LIMIT),
    )(xf, w1_k, b1_k)

    # ---- stage 2: fused MetaAconC + 3x3 conv + MetaAconC + CA pooling ---------
    R = _pick_chunk_rows(H, W)
    full2 = lambda b: (0, 0)
    x1f, ssum, smax = pl.pallas_call(
        functools.partial(_cv2_fused_kernel, H=H, W=W, R=R, precision=precision),
        out_shape=(jax.ShapeDtypeStruct((B, HW, C2p), dt),
                   jax.ShapeDtypeStruct((B, 1, C2p), jnp.float32),
                   jax.ShapeDtypeStruct((B, 1, C2p), jnp.float32)),
        grid=(B,),
        in_specs=[pl.BlockSpec((None, HW, Cmp), lambda b: (b, 0, 0)),
                  pl.BlockSpec((2, Cmp), full2),
                  pl.BlockSpec(acon1[1].shape, full2),
                  pl.BlockSpec(acon1[2].shape, full2),
                  pl.BlockSpec(acon1[3].shape, full2),
                  pl.BlockSpec(acon1[4].shape, full2),
                  pl.BlockSpec((9, Cmp, C2p), lambda b: (0, 0, 0)),
                  pl.BlockSpec((1, C2p), full2),
                  pl.BlockSpec((2, C2p), full2),
                  pl.BlockSpec(acon2[1].shape, full2),
                  pl.BlockSpec(acon2[2].shape, full2),
                  pl.BlockSpec(acon2[3].shape, full2),
                  pl.BlockSpec(acon2[4].shape, full2)],
        out_specs=(pl.BlockSpec((None, HW, C2p), lambda b: (b, 0, 0)),
                   pl.BlockSpec((None, 1, C2p), lambda b: (b, 0, 0)),
                   pl.BlockSpec((None, 1, C2p), lambda b: (b, 0, 0))),
        scratch_shapes=[pltpu.VMEM((HW + 2 * W + 2, Cmp), dt)],
        compiler_params=pltpu.CompilerParams(
            dimension_semantics=("parallel",),
            vmem_limit_bytes=_VMEM_LIMIT),
    )(z1f, acon1[0], acon1[1], acon1[2], acon1[3], acon1[4],
      w2_k, b2_k,
      acon2[0], acon2[1], acon2[2], acon2[3], acon2[4])

    # ---- ChannelAttention MLP on pooled stats (tiny (B, C2) math, plain JAX) --
    avg = ssum[:, 0, :C2] * (1.0 / HW)
    mx = smax[:, 0, :C2]
    f1, f2 = params["ca_f1_w"], params["ca_f2_w"]
    ca = jax.nn.sigmoid(jax.nn.relu(avg @ f1.T) @ f2.T +
                        jax.nn.relu(mx @ f1.T) @ f2.T)
    ca_p = jnp.zeros((B, 1, C2p), jnp.float32).at[:, 0, :C2].set(
        ca.astype(jnp.float32))

    # ---- stage 3: channel scale + spatial attention + residual ----------------
    x1 = x1f.reshape(B, H, W, C2p)                                  # free view
    wsa = jnp.transpose(params["sa_w"][0], (1, 2, 0)).reshape(
        ksize * ksize, 2).astype(jnp.float32)
    p = (ksize - 1) // 2

    inputs = [x1, ca_p, wsa]
    in_specs = [pl.BlockSpec((None, H, W, C2p), lambda b: (b, 0, 0, 0)),
                pl.BlockSpec((None, 1, C2p), lambda b: (b, 0, 0)),
                pl.BlockSpec((ksize * ksize, 2), lambda b: (0, 0))]
    if add:
        x_res = x if C1 == C2p else jnp.pad(
            x, ((0, 0), (0, 0), (0, 0), (0, C2p - C1)))
        inputs.append(x_res)
        in_specs.append(pl.BlockSpec((None, H, W, C2p), lambda b: (b, 0, 0, 0)))

    out = pl.pallas_call(
        functools.partial(_attention_kernel, H=H, W=W, ksize=ksize,
                          c2_real=C2, add=add),
        out_shape=jax.ShapeDtypeStruct((B, H, W, C2p), dt),
        grid=(B,),
        in_specs=in_specs,
        out_specs=pl.BlockSpec((None, H, W, C2p), lambda b: (b, 0, 0, 0)),
        scratch_shapes=[pltpu.VMEM((H + 2 * p, W + 2 * p, 2), jnp.float32)],
        compiler_params=pltpu.CompilerParams(
            dimension_semantics=("parallel",),
            vmem_limit_bytes=_VMEM_LIMIT),
    )(*inputs)

    return out[..., :C2] if C2p != C2 else out


# ---------------------------------------------------------------------------
# Pure-JAX reference (matches the PyTorch module, NHWC layout)
# ---------------------------------------------------------------------------
def _conv2d_nhwc(x, w_oihw, pad, groups=1):
    w_hwio = jnp.transpose(w_oihw, (2, 3, 1, 0))
    return jax.lax.conv_general_dilated(
        x, w_hwio, window_strides=(1, 1), padding=[(pad, pad), (pad, pad)],
        dimension_numbers=("NHWC", "HWIO", "NHWC"),
        feature_group_count=groups, precision=jax.lax.Precision.HIGHEST)


def _bn_ref(x, gamma, beta, mean, var, eps=1e-5):
    scale = gamma / jnp.sqrt(var + eps)
    return x * scale + (beta - mean * scale)


def _meta_aconc_ref(x, p):
    y = jnp.mean(x, axis=(1, 2))
    beta = jax.nn.sigmoid(
        (y @ p["fc1_w"].T + p["fc1_b"]) @ p["fc2_w"].T + p["fc2_b"])
    beta = beta[:, None, None, :]
    p1 = p["p1"][None, None, None, :]
    p2 = p["p2"][None, None, None, :]
    dpx = (p1 - p2) * x
    return dpx * jax.nn.sigmoid(beta * dpx) + p2 * x


def cbam_bottleneck_reference(x, params):
    z1 = _bn_ref(_conv2d_nhwc(x, params["cv1_w"], 0), *params["cv1_bn"])
    a1 = _meta_aconc_ref(z1, params["cv1_act"])
    z2 = _bn_ref(_conv2d_nhwc(a1, params["cv2_w"], 1, groups=params["g"]),
                 *params["cv2_bn"])
    x1 = _meta_aconc_ref(z2, params["cv2_act"])

    avg = jnp.mean(x1, axis=(1, 2))
    mx = jnp.max(x1, axis=(1, 2))
    f1, f2 = params["ca_f1_w"], params["ca_f2_w"]
    ca = jax.nn.sigmoid(jax.nn.relu(avg @ f1.T) @ f2.T +
                        jax.nn.relu(mx @ f1.T) @ f2.T)[:, None, None, :]
    out = ca * x1

    cat = jnp.concatenate([jnp.mean(out, axis=-1, keepdims=True),
                           jnp.max(out, axis=-1, keepdims=True)], axis=-1)
    pad = (params["ksize"] - 1) // 2
    sa = jax.nn.sigmoid(_conv2d_nhwc(cat, params["sa_w"], pad))
    out = sa * out
    return x + out if params["add"] else out


# ---------------------------------------------------------------------------
# Test
# ---------------------------------------------------------------------------
def _uniform(key, shape, fan_in):
    bound = 1.0 / (fan_in ** 0.5)
    return jax.random.uniform(key, shape, jnp.float32, -bound, bound)


def _make_aconc_params(key, c, r=16):
    m = max(r, c // r)
    k = jax.random.split(key, 6)
    return {"p1": jax.random.normal(k[0], (c,), jnp.float32),
            "p2": jax.random.normal(k[1], (c,), jnp.float32),
            "fc1_w": _uniform(k[2], (m, c), c),
            "fc1_b": _uniform(k[3], (m,), c),
            "fc2_w": _uniform(k[4], (c, m), m),
            "fc2_b": _uniform(k[5], (c,), m)}


if __name__ == "__main__":
    key = jax.random.PRNGKey(0)
    ks = iter(jax.random.split(key, 16))

    B, H, W = 2, 16, 16
    c1, c2, e, ratio, ksize, g, shortcut = 32, 32, 0.5, 16, 7, 1, True
    c_ = int(c2 * e)

    params = {
        "g": g, "ksize": ksize, "add": bool(shortcut and c1 == c2),
        "cv1_w": _uniform(next(ks), (c_, c1, 1, 1), c1),
        "cv1_bn": (jax.random.uniform(next(ks), (c_,), jnp.float32, 0.5, 1.5),
                   0.1 * jax.random.normal(next(ks), (c_,), jnp.float32),
                   0.1 * jax.random.normal(next(ks), (c_,), jnp.float32),
                   jax.random.uniform(next(ks), (c_,), jnp.float32, 0.5, 1.5)),
        "cv1_act": _make_aconc_params(next(ks), c_),
        "cv2_w": _uniform(next(ks), (c2, c_, 3, 3), c_ * 9),
        "cv2_bn": (jax.random.uniform(next(ks), (c2,), jnp.float32, 0.5, 1.5),
                   0.1 * jax.random.normal(next(ks), (c2,), jnp.float32),
                   0.1 * jax.random.normal(next(ks), (c2,), jnp.float32),
                   jax.random.uniform(next(ks), (c2,), jnp.float32, 0.5, 1.5)),
        "cv2_act": _make_aconc_params(next(ks), c2),
        "ca_f1_w": _uniform(next(ks), (c2 // ratio, c2), c2),
        "ca_f2_w": _uniform(next(ks), (c2, c2 // ratio), c2 // ratio),
        "sa_w": _uniform(next(ks), (1, 2, ksize, ksize), 2 * ksize * ksize),
    }

    x = jax.random.normal(next(ks), (B, H, W, c1), jnp.float32)        # NHWC

    # numerics check: f32 inputs + HIGHEST-precision matmuls (verification only)
    ref = cbam_bottleneck_reference(x, params)
    out_f32 = cbam_bottleneck_forward(x, params,
                                      precision=jax.lax.Precision.HIGHEST)
    out_f32 = jax.block_until_ready(out_f32)
    assert out_f32.shape == ref.shape
    err_f32 = float(jnp.max(jnp.abs(out_f32 - ref)))
    assert jnp.allclose(out_f32, ref, atol=1e-2, rtol=1e-2), \
        f"f32 mismatch: {err_f32}"

    # production path: bf16 slabs + default (single-pass bf16) MXU precision
    x_bf = x.astype(jnp.bfloat16)
    out_bf = cbam_bottleneck_forward(x_bf, params)
    out_bf = jax.block_until_ready(out_bf)
    ref_bf = cbam_bottleneck_reference(x_bf.astype(jnp.float32), params)
    err_bf = float(jnp.max(jnp.abs(out_bf.astype(jnp.float32) - ref_bf)))
    assert jnp.allclose(out_bf.astype(jnp.float32), ref_bf,
                        atol=2.5e-1, rtol=2.5e-1), f"bf16 mismatch: {err_bf}"

    print("KERNEL_OK")
</pallas_src>

<mosaic_0001>
module attributes {stable_mosaic.version = 11 : i64} {
  func.func @_cv1_kernel(%arg0: i32, %arg1: i32, %arg2: memref<1x256x32xf32, #tpu.memory_space<vmem>>, %arg3: memref<32x128xf32, #tpu.memory_space<vmem>>, %arg4: memref<1x128xf32, #tpu.memory_space<vmem>>, %arg5: memref<1x256x128xf32, #tpu.memory_space<vmem>>) attributes {dimension_semantics = [#tpu.dimension_semantics<parallel>, #tpu.dimension_semantics<parallel>], iteration_bounds = array<i64: 2, 1>, scalar_prefetch = 0 : i64, scratch_operands = 0 : i64, tpu.core_type = #tpu.core_type<tc>, window_params = [{transform_indices = @transform_0, window_bounds = array<i64: 1, 256, 32>}, {pipeline_mode = #tpu.pipeline_mode<synchronous>, transform_indices = @transform_1, window_bounds = array<i64: 32, 128>}, {pipeline_mode = #tpu.pipeline_mode<synchronous>, transform_indices = @transform_2, window_bounds = array<i64: 1, 128>}, {transform_indices = @transform_3, window_bounds = array<i64: 1, 256, 128>}]} {
    %c0 = arith.constant 0 : index
    %c0_0 = arith.constant 0 : index
    %c0_1 = arith.constant 0 : index
    %0 = vector.load %arg2[%c0, %c0_0, %c0_1] : memref<1x256x32xf32, #tpu.memory_space<vmem>>, vector<1x256x32xf32>
    %1 = vector.shape_cast %0 : vector<1x256x32xf32> to vector<256x32xf32>
    %c0_2 = arith.constant 0 : index
    %c0_3 = arith.constant 0 : index
    %2 = vector.load %arg3[%c0_2, %c0_3] : memref<32x128xf32, #tpu.memory_space<vmem>>, vector<32x128xf32>
    %cst = arith.constant dense<0.000000e+00> : vector<256x128xf32>
    %3 = tpu.matmul %1, %2, %cst {dimension_numbers = #tpu.dot_dimension_numbers<[1], [0], [0], [1], [0, 0, 1, 1], [], []>, precision = #tpu.contract_precision<fp32>} : vector<256x32xf32>, vector<32x128xf32>, vector<256x128xf32> -> vector<256x128xf32>
    %c0_4 = arith.constant 0 : index
    %c0_5 = arith.constant 0 : index
    %4 = vector.load %arg4[%c0_4, %c0_5] : memref<1x128xf32, #tpu.memory_space<vmem>>, vector<1x128xf32>
    %5 = vector.broadcast %4 : vector<1x128xf32> to vector<256x128xf32>
    %6 = arith.addf %3, %5 : vector<256x128xf32>
    %c0_6 = arith.constant 0 : index
    %c0_7 = arith.constant 0 : index
    %c0_8 = arith.constant 0 : index
    %7 = vector.load %arg5[%c0_6, %c0_7, %c0_8] : memref<1x256x128xf32, #tpu.memory_space<vmem>>, vector<1x256x128xf32>
    %8 = vector.shape_cast %7 : vector<1x256x128xf32> to vector<256x128xf32>
    %9 = vector.shape_cast %6 : vector<256x128xf32> to vector<1x256x128xf32>
    tpu.vector_store %arg5[%c0_6, %c0_7, %c0_8], %9 {strides = array<i32>} : memref<1x256x128xf32, #tpu.memory_space<vmem>>, vector<1x256x128xf32>,
    return
  }
  func.func @transform_0(%arg0: i32, %arg1: i32) -> (i32, i32, i32) {
    %c0_i32 = arith.constant 0 : i32
    %c0_i32_0 = arith.constant 0 : i32
    return %arg0, %arg1, %c0_i32 : i32, i32, i32
  }
  func.func @transform_1(%arg0: i32, %arg1: i32) -> (i32, i32) {
    %c0_i32 = arith.constant 0 : i32
    %c0_i32_0 = arith.constant 0 : i32
    %c0_i32_1 = arith.constant 0 : i32
    return %c0_i32, %c0_i32_0 : i32, i32
  }
  func.func @transform_2(%arg0: i32, %arg1: i32) -> (i32, i32) {
    %c0_i32 = arith.constant 0 : i32
    %c0_i32_0 = arith.constant 0 : i32
    %c0_i32_1 = arith.constant 0 : i32
    return %c0_i32, %c0_i32_0 : i32, i32
  }
  func.func @transform_3(%arg0: i32, %arg1: i32) -> (i32, i32, i32) {
    %c0_i32 = arith.constant 0 : i32
    %c0_i32_0 = arith.constant 0 : i32
    return %arg0, %arg1, %c0_i32 : i32, i32, i32
  }
}

</mosaic_0001>

<llo_original>
// kernel: tpu_custom_call.1
$region0: #{tpu_custom_call.1}
  #allocation0 [shape = 'u32[]', space=smem, size = 0x4, offset = 0x4, fixed_abs, tag = 'smem constant byte address 0x4 - core index']
  #allocation1 [shape = 'u32[144,128]{1,0:T(1,128)}', space=vmem, size = 0x12000, scoped, tag = 'internal scratch']
  %s0 = inlined_call_operand.vmem [shape: f32[2,256,32], index: 0, kind: input, shape index: {}]
  %s1 = inlined_call_operand.vmem [shape: f32[32,128], index: 1, kind: input, shape index: {}]
  %s2 = inlined_call_operand.vmem [shape: f32[1,128], index: 2, kind: input, shape index: {}]
  %s3 = inlined_call_operand.hbm [shape: f32[2,256,128], index: 3, kind: output, shape index: {}]
  %s4 = sld [smem:[#allocation0]]
  $region45: #{tpu_custom_call.1} parent=0
    _
  %s6 = ssub.s32 1, %s4
  %s7 = scalar_select 0, %s6, %s4
  $region1: #{tpu_custom_call.1} parent=0
    #allocation2 [shape = 'u8[262144]{0}', space=vmem, size = 0x40000, scoped, tag = 'output window, operand 0']
    #allocation3 [shape = 's32[2]{0}', space=sflag, size = 0x8, scoped, tag = 'scoped memory for tpu_custom_call.1']
    %8 = vsyncpa [#allocation3], 0
    %s9 = scalar_lea.sflag [#allocation3], 1
    %10 = vsyncpa %s9, 0
    loop: start=0, step=1, limit=4
    $region2: #{tpu_custom_call.1} parent=1 // loop_pre_header
      _
    $region3: #{tpu_custom_call.1} parent=1 // loop_header
      %s12 = sphi 0, %s16
      %p13 = scmp.ge.s32.totalorder %s12, 4
      %s19 = sphi 0, %s31
      %s20 = sphi 0, %s27
      %s21 = sphi 0, %s19
      %s22 = sphi 0, %s20
      %s23 = sphi 0, %s21
      %s24 = sphi 0, %s22
      %s36 = sphi 0, %s38
      %s39 = sphi 0, %s36
      %s40 = sphi 0, %s39
      %s56 = sphi 0, %s40
      %s60 = sphi 0, %s60
      %s62 = sphi 0, %s60
      %s63 = sphi 0, %s62
      %s77 = sphi 0, %s63
      %s81 = sphi 0, %s81
      %s83 = sphi 0, %s81
      %s84 = sphi 0, %s83
      %s98 = sphi 0, %s84
      %s106 = sphi 0, %s108
      %s109 = sphi 0, %s106
      %s110 = sphi 0, %s109
      %s126 = sphi 0, %s110
    $region4: #{tpu_custom_call.1} parent=1 // loop_header_branch
      %15 = sbr.rel (%p13) target = $region8
    $region5: #{tpu_custom_call.1} parent=1 // loop_body
      %s17 = ssub.s32 %s12, 1
      %s18 = ssub.s32 %s12, 2
      %s25 = sadd.s32 1, %s20
      %p26 = scmp.ge.s32.totalorder %s25, 1
      %s27 = scalar_select %p26, 0, %s25
      %s28 = sadd.s32 1, %s19
      %s29 = scalar_select %p26, %s28, %s19
      %p30 = scmp.ge.s32.totalorder %s29, 2
      %s31 = scalar_select %p30, 0, %s29
      %s32 = ssub.s32 %s19, %s31
      %s33 = ssub.s32 %s20, %s27
      %s34 = sor.u32 %s32, %s33
      %p35 = scmp.eq.s32.totalorder %s34, 0
      %s37 = sadd.s32 %s36, 1
      %s38 = scalar_select %p35, %s36, %s37
      %p41 = pneg %p35
      %p42 = scmp.eq.s32.totalorder %s12, 1
      %p43 = por %p41, %p42
      %p44 = scmp.ne.s32.totalorder %s36, %s39
      %p45 = scmp.eq.s32.totalorder %s12, 0
      %p46 = por %p44, %p45
      %p47 = scmp.ne.s32.totalorder %s36, %s39
      %p48 = scmp.eq.s32.totalorder %s17, 1
      %p49 = por %p47, %p48
      %p50 = scmp.ne.s32.totalorder %s39, %s40
      %p51 = scmp.eq.s32.totalorder %s17, 0
      %p52 = por %p50, %p51
      %p53 = scmp.ne.s32.totalorder %s39, %s40
      %p54 = scmp.eq.s32.totalorder %s18, 1
      %p55 = por %p53, %p54
      %p57 = scmp.ne.s32.totalorder %s40, %s56
      %p58 = scmp.eq.s32.totalorder %s18, 0
      %p59 = por %p57, %p58
      %s61 = sadd.s32 %s60, 1
      %p64 = scmp.eq.s32.totalorder %s12, 1
      %p65 = scmp.ne.s32.totalorder %s60, %s62
      %p66 = scmp.eq.s32.totalorder %s12, 0
      %p67 = por %p65, %p66
      %p68 = scmp.ne.s32.totalorder %s60, %s62
      %p69 = scmp.eq.s32.totalorder %s17, 1
      %p70 = por %p68, %p69
      %p71 = scmp.ne.s32.totalorder %s62, %s63
      %p72 = scmp.eq.s32.totalorder %s17, 0
      %p73 = por %p71, %p72
      %p74 = scmp.ne.s32.totalorder %s62, %s63
      %p75 = scmp.eq.s32.totalorder %s18, 1
      %p76 = por %p74, %p75
      %p78 = scmp.ne.s32.totalorder %s63, %s77
      %p79 = scmp.eq.s32.totalorder %s18, 0
      %p80 = por %p78, %p79
      %s82 = sadd.s32 %s81, 1
      %p85 = scmp.eq.s32.totalorder %s12, 1
      %p86 = scmp.ne.s32.totalorder %s81, %s83
      %p87 = scmp.eq.s32.totalorder %s12, 0
      %p88 = por %p86, %p87
      %p89 = scmp.ne.s32.totalorder %s81, %s83
      %p90 = scmp.eq.s32.totalorder %s17, 1
      %p91 = por %p89, %p90
      %p92 = scmp.ne.s32.totalorder %s83, %s84
      %p93 = scmp.eq.s32.totalorder %s17, 0
      %p94 = por %p92, %p93
      %p95 = scmp.ne.s32.totalorder %s83, %s84
      %p96 = scmp.eq.s32.totalorder %s18, 1
      %p97 = por %p95, %p96
      %p99 = scmp.ne.s32.totalorder %s84, %s98
      %p100 = scmp.eq.s32.totalorder %s18, 0
      %p101 = por %p99, %p100
      %s102 = ssub.s32 %s19, %s31
      %s103 = ssub.s32 %s20, %s27
      %s104 = sor.u32 %s102, %s103
      %p105 = scmp.eq.s32.totalorder %s104, 0
      %s107 = sadd.s32 %s106, 1
      %s108 = scalar_select %p105, %s106, %s107
      %p111 = pneg %p105
      %p112 = scmp.eq.s32.totalorder %s12, 1
      %p113 = por %p111, %p112
      %p114 = scmp.ne.s32.totalorder %s106, %s109
      %p115 = scmp.eq.s32.totalorder %s12, 0
      %p116 = por %p114, %p115
      %p117 = scmp.ne.s32.totalorder %s106, %s109
      %p118 = scmp.eq.s32.totalorder %s17, 1
      %p119 = por %p117, %p118
      %p120 = scmp.ne.s32.totalorder %s109, %s110
      %p121 = scmp.eq.s32.totalorder %s17, 0
      %p122 = por %p120, %p121
      %p123 = scmp.ne.s32.totalorder %s109, %s110
      %p124 = scmp.eq.s32.totalorder %s18, 1
      %p125 = por %p123, %p124
      %p127 = scmp.ne.s32.totalorder %s110, %s126
      %p128 = scmp.eq.s32.totalorder %s18, 0
      %p129 = por %p127, %p128
      %p130 = scmp.le.s32.totalorder 1, %s12
      %p131 = scmp.lt.s32.totalorder %s12, 3
      %p132 = pnand %p130, %p131
      %p133 = pneg %p132
      // Predicated region
      $region9: #{tpu_custom_call.1} parent=5 // pred_check
        _
      $region10: #{tpu_custom_call.1} parent=5 // pred_check_branch
        %135 = sbr.rel (%p132) target = $region12
      $region11: #{tpu_custom_call.1} parent=5 // pred_region
        %s136 = ssub.s32 %s12, 1
        // Predicated region
        $region13: #{tpu_custom_call.1} parent=11 // pred_check
          %p137 = pneg %p73
        $region14: #{tpu_custom_call.1} parent=11 // pred_check_branch
          %139 = sbr.rel (%p137) target = $region16
        $region15: #{tpu_custom_call.1} parent=11 // pred_region
          _
        $region16: #{tpu_custom_call.1} parent=11 // pred_fallthru
          _
        // Predicated region
        $region17: #{tpu_custom_call.1} parent=11 // pred_check
          %p140 = pneg %p94
        $region18: #{tpu_custom_call.1} parent=11 // pred_check_branch
          %142 = sbr.rel (%p140) target = $region20
        $region19: #{tpu_custom_call.1} parent=11 // pred_region
          _
        $region20: #{tpu_custom_call.1} parent=11 // pred_fallthru
          _
      $region12: #{tpu_custom_call.1} parent=5 // pred_fallthru
        _
      %p143 = scmp.lt.s32.totalorder %s12, 2
      // Predicated region
      $region21: #{tpu_custom_call.1} parent=5 // pred_check
        %p144 = pneg %p143
      $region22: #{tpu_custom_call.1} parent=5 // pred_check_branch
        %146 = sbr.rel (%p144) target = $region24
      $region23: #{tpu_custom_call.1} parent=5 // pred_region
        // Predicated region
        $region25: #{tpu_custom_call.1} parent=23 // pred_check
          %p147 = pneg %p46
        $region26: #{tpu_custom_call.1} parent=23 // pred_check_branch
          %149 = sbr.rel (%p147) target = $region28
        $region27: #{tpu_custom_call.1} parent=23 // pred_region
          %s150 = smul.u32 32, %s20
          %p151 = scmp.lt.s32.totalorder %s19, 1
          %s152 = scalar_select %p151, %s19, 1
          %p153 = scmp.lt.s32.totalorder %s150, 31
          %s154 = scalar_select %p153, %s150, 31
          %s155 = smul.addr %s152, 32
          %s156 = sadd.s32 %s154, %s155
          %s157 = smul.addr %s156, 8
          %s158 = scalar_lea.vmem %s0, %s157
          %s159 = smul.u32 32, %s20
        $region28: #{tpu_custom_call.1} parent=23 // pred_fallthru
          _
      $region24: #{tpu_custom_call.1} parent=5 // pred_fallthru
        _
      %p160 = scmp.le.s32.totalorder 1, %s12
      %p161 = scmp.lt.s32.totalorder %s12, 3
      %p162 = pnand %p160, %p161
      %p163 = pneg %p162
      // Predicated region
      $region29: #{tpu_custom_call.1} parent=5 // pred_check
        _
      $region30: #{tpu_custom_call.1} parent=5 // pred_check_branch
        %165 = sbr.rel (%p162) target = $region32
      $region31: #{tpu_custom_call.1} parent=5 // pred_region
        %s166 = ssub.s32 %s12, 1
        %s167 = smul.u32 32, %s22
        %p168 = scmp.lt.s32.totalorder %s21, 1
        %s169 = scalar_select %p168, %s21, 1
        %p170 = scmp.lt.s32.totalorder %s167, 31
        %s171 = scalar_select %p170, %s167, 31
        %s172 = smul.addr %s169, 32
        %s173 = sadd.s32 %s171, %s172
        %s174 = smul.addr %s173, 8
        %s175 = scalar_lea.vmem %s0, %s174
        %p176 = pneg %p52
        %p177 = pneg %p49
        %p178 = pneg %p73
        %p179 = pneg %p70
        %p180 = pneg %p94
        %p181 = pneg %p91
        %p182 = pneg %p122
        %p183 = pneg %p119
        %s184 = sand.u32 %s109, 1
        %s185 = scalar_lea.sflag [#allocation3], %s184
        %s186 = sand.u32 %s109, 1
        %s187 = smul.addr %s186, 256
        %s188 = scalar_lea.vmem [#allocation2], %s187
        %s189 = smul.u32 32, %s22
        %p190 = scmp.lt.s32.totalorder %s21, 1
        %s191 = scalar_select %p190, %s21, 1
        %p192 = scmp.lt.s32.totalorder %s189, 31
        %s193 = scalar_select %p192, %s189, 31
        %s194 = smul.addr %s191, 32
        %s195 = sadd.s32 %s193, %s194
        %s196 = smul.addr %s195, 8
        %s197 = scalar_lea.vmem %s0, %s196
        %s198 = smul.u32 32, %s22
        %s199 = smul.u32 32, %s22
        %v200 = vld [vmem:[%s197] sm:$0xff]
        %v201 = vld [vmem:[%s197 + $0x8] sm:$0xff]
        %v202 = vld [vmem:[%s197 + $0x10] sm:$0xff]
        %v203 = vld [vmem:[%s197 + $0x18] sm:$0xff]
        %v204 = vld [vmem:[%s197 + $0x20] sm:$0xff]
        %v205 = vld [vmem:[%s197 + $0x28] sm:$0xff]
        %v206 = vld [vmem:[%s197 + $0x30] sm:$0xff]
        %v207 = vld [vmem:[%s197 + $0x38] sm:$0xff]
        %v208 = vld [vmem:[%s197 + $0x40] sm:$0xff]
        %v209 = vld [vmem:[%s197 + $0x48] sm:$0xff]
        %v210 = vld [vmem:[%s197 + $0x50] sm:$0xff]
        %v211 = vld [vmem:[%s197 + $0x58] sm:$0xff]
        %v212 = vld [vmem:[%s197 + $0x60] sm:$0xff]
        %v213 = vld [vmem:[%s197 + $0x68] sm:$0xff]
        %v214 = vld [vmem:[%s197 + $0x70] sm:$0xff]
        %v215 = vld [vmem:[%s197 + $0x78] sm:$0xff]
        %v216 = vld [vmem:[%s197 + $0x80] sm:$0xff]
        %v217 = vld [vmem:[%s197 + $0x88] sm:$0xff]
        %v218 = vld [vmem:[%s197 + $0x90] sm:$0xff]
        %v219 = vld [vmem:[%s197 + $0x98] sm:$0xff]
        %v220 = vld [vmem:[%s197 + $0xa0] sm:$0xff]
        %v221 = vld [vmem:[%s197 + $0xa8] sm:$0xff]
        %v222 = vld [vmem:[%s197 + $0xb0] sm:$0xff]
        %v223 = vld [vmem:[%s197 + $0xb8] sm:$0xff]
        %v224 = vld [vmem:[%s197 + $0xc0] sm:$0xff]
        %v225 = vld [vmem:[%s197 + $0xc8] sm:$0xff]
        %v226 = vld [vmem:[%s197 + $0xd0] sm:$0xff]
        %v227 = vld [vmem:[%s197 + $0xd8] sm:$0xff]
        %v228 = vld [vmem:[%s197 + $0xe0] sm:$0xff]
        %v229 = vld [vmem:[%s197 + $0xe8] sm:$0xff]
        %v230 = vld [vmem:[%s197 + $0xf0] sm:$0xff]
        %v231 = vld [vmem:[%s197 + $0xf8] sm:$0xff]
        %v232 = vld [vmem:[%s1] sm:$0xff]
        %v233 = vld [vmem:[%s1 + $0x8] sm:$0xff]
        %v234 = vld [vmem:[%s1 + $0x10] sm:$0xff]
        %v235 = vld [vmem:[%s1 + $0x18] sm:$0xff]
        %v236 = vld [vmem:[%s2] sm:$0x1]
        %v238 = vlaneseq
        %v239 = vshrl.u32 %v238, 7
        %v240 = vsub.s32 0, %v239
        %v241 = vrot.slane %v236, %v240
        %vm243 = vcmask 261120
        %v245 = vsel %vm243, %v200, 0
        %v248 = vsel %vm243, %v201, 0
        %v251 = vsel %vm243, %v202, 0
        %v254 = vsel %vm243, %v203, 0
        %v257 = vsel %vm243, %v204, 0
        %v260 = vsel %vm243, %v205, 0
        %v263 = vsel %vm243, %v206, 0
        %v266 = vsel %vm243, %v207, 0
        %v269 = vsel %vm243, %v208, 0
        %v272 = vsel %vm243, %v209, 0
        %v275 = vsel %vm243, %v210, 0
        %v278 = vsel %vm243, %v211, 0
        %v281 = vsel %vm243, %v212, 0
        %v284 = vsel %vm243, %v213, 0
        %v287 = vsel %vm243, %v214, 0
        %v290 = vsel %vm243, %v215, 0
        %v293 = vsel %vm243, %v216, 0
        %v296 = vsel %vm243, %v217, 0
        %v299 = vsel %vm243, %v218, 0
        %v302 = vsel %vm243, %v219, 0
        %v305 = vsel %vm243, %v220, 0
        %v308 = vsel %vm243, %v221, 0
        %v311 = vsel %vm243, %v222, 0
        %v314 = vsel %vm243, %v223, 0
        %v317 = vsel %vm243, %v224, 0
        %v320 = vsel %vm243, %v225, 0
        %v323 = vsel %vm243, %v226, 0
        %v326 = vsel %vm243, %v227, 0
        %v329 = vsel %vm243, %v228, 0
        %v332 = vsel %vm243, %v229, 0
        %v335 = vsel %vm243, %v230, 0
        %v338 = vsel %vm243, %v231, 0
        %340 = vmatprep.subr.mxu0 0.0
        %v341 = vand.u32 %v232, 4294901760
        %342 = vmatpush1.msra.mxu0 %v341
        %343 = vmatprep.subr.mxu0 0.0
        %v344 = vand.u32 %v233, 4294901760
        %345 = vmatpush1.msra.mxu0 %v344
        %346 = vmatprep.subr.mxu0 0.0
        %v347 = vand.u32 %v234, 4294901760
        %348 = vmatpush1.msra.mxu0 %v347
        %349 = vmatprep.subr.mxu0 0.0
        %v350 = vand.u32 %v235, 4294901760
        %351 = vmatpush1.msra.mxu0 %v350
        %352 = vmatprep.subr.mxu0 0.0
        %353 = vmatpush1.msra.mxu0 0.0
        %354 = vmatprep.subr.mxu0 0.0
        %355 = vmatpush1.msra.mxu0 0.0
        %356 = vmatprep.subr.mxu0 0.0
        %357 = vmatpush1.msra.mxu0 0.0
        %358 = vmatprep.subr.mxu0 0.0
        %359 = vmatpush1.msra.mxu0 0.0
        %360 = vmatprep.subr.mxu0 0.0
        %361 = vmatpush1.msra.mxu0 0.0
        %362 = vmatprep.subr.mxu0 0.0
        %363 = vmatpush1.msra.mxu0 0.0
        %364 = vmatprep.subr.mxu0 0.0
        %365 = vmatpush1.msra.mxu0 0.0
        %366 = vmatprep.subr.mxu0 0.0
        %367 = vmatpush1.msra.mxu0 0.0
        %368 = vmatprep.subr.mxu0 0.0
        %369 = vmatpush1.msra.mxu0 0.0
        %370 = vmatprep.subr.mxu0 0.0
        %371 = vmatpush1.msra.mxu0 0.0
        %372 = vmatprep.subr.mxu0 0.0
        %373 = vmatpush1.msra.mxu0 0.0
        %374 = vmatprep.subr.mxu0 0.0
        %375 = vmatpush1.msra.mxu0 0.0
        %376 = vmatprep.subr.mxu0 0.0
        %377 = vmatpush1.msra.mxu0 0.0
        %378 = vmatprep.subr.mxu0 0.0
        %379 = vmatpush1.msra.mxu0 0.0
        %380 = vmatprep.subr.mxu0 0.0
        %381 = vmatpush1.msra.mxu0 0.0
        %382 = vmatprep.subr.mxu0 0.0
        %383 = vmatpush1.msra.mxu0 0.0
        %384 = vmatprep.subr.mxu0 0.0
        %385 = vmatpush1.msra.mxu0 0.0
        %386 = vmatprep.subr.mxu0 0.0
        %387 = vmatpush1.msra.mxu0 0.0
        %388 = vmatprep.subr.mxu0 0.0
        %389 = vmatpush1.msra.mxu0 0.0
        %390 = vmatprep.subr.mxu0 0.0
        %391 = vmatpush1.msra.mxu0 0.0
        %392 = vmatprep.subr.mxu0 0.0
        %393 = vmatpush1.msra.mxu0 0.0
        %394 = vmatprep.subr.mxu0 0.0
        %395 = vmatpush1.msra.mxu0 0.0
        %396 = vmatprep.subr.mxu0 0.0
        %397 = vmatpush1.msra.mxu0 0.0
        %398 = vmatprep.subr.mxu0 0.0
        %399 = vmatpush1.msra.mxu0 0.0
        %400 = vmatprep.subr.mxu0 0.0
        %401 = vmatpush1.msra.mxu0 0.0
        %402 = vmatprep.subr.mxu0 0.0
        %403 = vmatpush1.msra.mxu0 0.0
        %404 = vmatprep.subr.mxu0 0.0
        %405 = vmatpush1.msra.mxu0 0.0
        %406 = vmatprep.subr.mxu0 0.0
        %407 = vmatpush1.msra.mxu0 0.0
        %408 = vmatprep.mubr.f32.mxu0 0.0
        %v409 = vand.u32 %v245, 4294901760
        %v410 = vsub.f32 %v245, %v409
        %v411 = vand.u32 %v410, 4294901760
        %v412 = vsub.f32 %v410, %v411
        %v413 = vand.u32 %v412, 4294901760
        %414 = vmatmul.mubr.f32.gmra.mrb[0].mxu0 %v413
        %v415 = vpop.f32.mrb[0].mxu0
        %v416 = vadd.f32 %v241, %v415
        %v417 = vpop.f32.mrb[0].mxu0
        %418 = vmatprep.mubr.f32.mxu0 0.0
        %v419 = vand.u32 %v248, 4294901760
        %v420 = vsub.f32 %v248, %v419
        %v421 = vand.u32 %v420, 4294901760
        %v422 = vsub.f32 %v420, %v421
        %v423 = vand.u32 %v422, 4294901760
        %424 = vmatmul.mubr.f32.gmra.mrb[0].mxu0 %v423
        %v425 = vpop.f32.mrb[0].mxu0
        %v426 = vadd.f32 %v241, %v425
        %v427 = vpop.f32.mrb[0].mxu0
        %428 = vmatprep.mubr.f32.mxu0 0.0
        %v429 = vand.u32 %v251, 4294901760
        %v430 = vsub.f32 %v251, %v429
        %v431 = vand.u32 %v430, 4294901760
        %v432 = vsub.f32 %v430, %v431
        %v433 = vand.u32 %v432, 4294901760
        %434 = vmatmul.mubr.f32.gmra.mrb[0].mxu0 %v433
        %v435 = vpop.f32.mrb[0].mxu0
        %v436 = vadd.f32 %v241, %v435
        %v437 = vpop.f32.mrb[0].mxu0
        %438 = vmatprep.mubr.f32.mxu0 0.0
        %v439 = vand.u32 %v254, 4294901760
        %v440 = vsub.f32 %v254, %v439
        %v441 = vand.u32 %v440, 4294901760
        %v442 = vsub.f32 %v440, %v441
        %v443 = vand.u32 %v442, 4294901760
        %444 = vmatmul.mubr.f32.gmra.mrb[0].mxu0 %v443
        %v445 = vpop.f32.mrb[0].mxu0
        %v446 = vadd.f32 %v241, %v445
        %v447 = vpop.f32.mrb[0].mxu0
        %448 = vmatprep.mubr.f32.mxu0 0.0
        %v449 = vand.u32 %v257, 4294901760
        %v450 = vsub.f32 %v257, %v449
        %v451 = vand.u32 %v450, 4294901760
        %v452 = vsub.f32 %v450, %v451
        %v453 = vand.u32 %v452, 4294901760
        %454 = vmatmul.mubr.f32.gmra.mrb[0].mxu0 %v453
        %v455 = vpop.f32.mrb[0].mxu0
        %v456 = vadd.f32 %v241, %v455
        %v457 = vpop.f32.mrb[0].mxu0
        %458 = vmatprep.mubr.f32.mxu0 0.0
        %v459 = vand.u32 %v260, 4294901760
        %v460 = vsub.f32 %v260, %v459
        %v461 = vand.u32 %v460, 4294901760
        %v462 = vsub.f32 %v460, %v461
        %v463 = vand.u32 %v462, 4294901760
        %464 = vmatmul.mubr.f32.gmra.mrb[0].mxu0 %v463
        %v465 = vpop.f32.mrb[0].mxu0
        %v466 = vadd.f32 %v241, %v465
        %v467 = vpop.f32.mrb[0].mxu0
        %468 = vmatprep.mubr.f32.mxu0 0.0
        %v469 = vand.u32 %v263, 4294901760
        %v470 = vsub.f32 %v263, %v469
        %v471 = vand.u32 %v470, 4294901760
        %v472 = vsub.f32 %v470, %v471
        %v473 = vand.u32 %v472, 4294901760
        %474 = vmatmul.mubr.f32.gmra.mrb[0].mxu0 %v473
        %v475 = vpop.f32.mrb[0].mxu0
        %v476 = vadd.f32 %v241, %v475
        %v477 = vpop.f32.mrb[0].mxu0
        %478 = vmatprep.mubr.f32.mxu0 0.0
        %v479 = vand.u32 %v266, 4294901760
        %v480 = vsub.f32 %v266, %v479
        %v481 = vand.u32 %v480, 4294901760
        %v482 = vsub.f32 %v480, %v481
        %v483 = vand.u32 %v482, 4294901760
        %484 = vmatmul.mubr.f32.gmra.mrb[0].mxu0 %v483
        %v485 = vpop.f32.mrb[0].mxu0
        %v486 = vadd.f32 %v241, %v485
        %v487 = vpop.f32.mrb[0].mxu0
        %488 = vmatprep.mubr.f32.mxu0 0.0
        %v489 = vand.u32 %v269, 4294901760
        %v490 = vsub.f32 %v269, %v489
        %v491 = vand.u32 %v490, 4294901760
        %v492 = vsub.f32 %v490, %v491
        %v493 = vand.u32 %v492, 4294901760
        %494 = vmatmul.mubr.f32.gmra.mrb[0].mxu0 %v493
        %v495 = vpop.f32.mrb[0].mxu0
        %v496 = vadd.f32 %v241, %v495
        %v497 = vpop.f32.mrb[0].mxu0
        %498 = vmatprep.mubr.f32.mxu0 0.0
        %v499 = vand.u32 %v272, 4294901760
        %v500 = vsub.f32 %v272, %v499
        %v501 = vand.u32 %v500, 4294901760
        %v502 = vsub.f32 %v500, %v501
        %v503 = vand.u32 %v502, 4294901760
        %504 = vmatmul.mubr.f32.gmra.mrb[0].mxu0 %v503
        %v505 = vpop.f32.mrb[0].mxu0
        %v506 = vadd.f32 %v241, %v505
        %v507 = vpop.f32.mrb[0].mxu0
        %508 = vmatprep.mubr.f32.mxu0 0.0
        %v509 = vand.u32 %v275, 4294901760
        %v510 = vsub.f32 %v275, %v509
        %v511 = vand.u32 %v510, 4294901760
        %v512 = vsub.f32 %v510, %v511
        %v513 = vand.u32 %v512, 4294901760
        %514 = vmatmul.mubr.f32.gmra.mrb[0].mxu0 %v513
        %v515 = vpop.f32.mrb[0].mxu0
        %v516 = vadd.f32 %v241, %v515
        %v517 = vpop.f32.mrb[0].mxu0
        %518 = vmatprep.mubr.f32.mxu0 0.0
        %v519 = vand.u32 %v278, 4294901760
        %v520 = vsub.f32 %v278, %v519
        %v521 = vand.u32 %v520, 4294901760
        %v522 = vsub.f32 %v520, %v521
        %v523 = vand.u32 %v522, 4294901760
        %524 = vmatmul.mubr.f32.gmra.mrb[0].mxu0 %v523
        %v525 = vpop.f32.mrb[0].mxu0
        %v526 = vadd.f32 %v241, %v525
        %v527 = vpop.f32.mrb[0].mxu0
        %528 = vmatprep.mubr.f32.mxu0 0.0
        %v529 = vand.u32 %v281, 4294901760
        %v530 = vsub.f32 %v281, %v529
        %v531 = vand.u32 %v530, 4294901760
        %v532 = vsub.f32 %v530, %v531
        %v533 = vand.u32 %v532, 4294901760
        %534 = vmatmul.mubr.f32.gmra.mrb[0].mxu0 %v533
        %v535 = vpop.f32.mrb[0].mxu0
        %v536 = vadd.f32 %v241, %v535
        %v537 = vpop.f32.mrb[0].mxu0
        %538 = vmatprep.mubr.f32.mxu0 0.0
        %v539 = vand.u32 %v284, 4294901760
        %v540 = vsub.f32 %v284, %v539
        %v541 = vand.u32 %v540, 4294901760
        %v542 = vsub.f32 %v540, %v541
        %v543 = vand.u32 %v542, 4294901760
        %544 = vmatmul.mubr.f32.gmra.mrb[0].mxu0 %v543
        %v545 = vpop.f32.mrb[0].mxu0
        %v546 = vadd.f32 %v241, %v545
        %v547 = vpop.f32.mrb[0].mxu0
        %548 = vmatprep.mubr.f32.mxu0 0.0
        %v549 = vand.u32 %v287, 4294901760
        %v550 = vsub.f32 %v287, %v549
        %v551 = vand.u32 %v550, 4294901760
        %v552 = vsub.f32 %v550, %v551
        %v553 = vand.u32 %v552, 4294901760
        %554 = vmatmul.mubr.f32.gmra.mrb[0].mxu0 %v553
        %v555 = vpop.f32.mrb[0].mxu0
        %v556 = vadd.f32 %v241, %v555
        %v557 = vpop.f32.mrb[0].mxu0
        %558 = vmatprep.mubr.f32.mxu0 0.0
        %v559 = vand.u32 %v290, 4294901760
        %v560 = vsub.f32 %v290, %v559
        %v561 = vand.u32 %v560, 4294901760
        %v562 = vsub.f32 %v560, %v561
        %v563 = vand.u32 %v562, 4294901760
        %564 = vmatmul.mubr.f32.gmra.mrb[0].mxu0 %v563
        %v565 = vpop.f32.mrb[0].mxu0
        %v566 = vadd.f32 %v241, %v565
        %v567 = vpop.f32.mrb[0].mxu0
        %568 = vmatprep.mubr.f32.mxu0 0.0
        %v569 = vand.u32 %v293, 4294901760
        %v570 = vsub.f32 %v293, %v569
        %v571 = vand.u32 %v570, 4294901760
        %v572 = vsub.f32 %v570, %v571
        %v573 = vand.u32 %v572, 4294901760
        %574 = vmatmul.mubr.f32.gmra.mrb[0].mxu0 %v573
        %v575 = vpop.f32.mrb[0].mxu0
        %v576 = vadd.f32 %v241, %v575
        %v577 = vpop.f32.mrb[0].mxu0
        %578 = vmatprep.mubr.f32.mxu0 0.0
        %v579 = vand.u32 %v296, 4294901760
        %v580 = vsub.f32 %v296, %v579
        %v581 = vand.u32 %v580, 4294901760
        %v582 = vsub.f32 %v580, %v581
        %v583 = vand.u32 %v582, 4294901760
        %584 = vmatmul.mubr.f32.gmra.mrb[0].mxu0 %v583
        %v585 = vpop.f32.mrb[0].mxu0
        %v586 = vadd.f32 %v241, %v585
        %v587 = vpop.f32.mrb[0].mxu0
        %588 = vmatprep.mubr.f32.mxu0 0.0
        %v589 = vand.u32 %v299, 4294901760
        %v590 = vsub.f32 %v299, %v589
        %v591 = vand.u32 %v590, 4294901760
        %v592 = vsub.f32 %v590, %v591
        %v593 = vand.u32 %v592, 4294901760
        %594 = vmatmul.mubr.f32.gmra.mrb[0].mxu0 %v593
        %v595 = vpop.f32.mrb[0].mxu0
        %v596 = vadd.f32 %v241, %v595
        %v597 = vpop.f32.mrb[0].mxu0
        %598 = vmatprep.mubr.f32.mxu0 0.0
        %v599 = vand.u32 %v302, 4294901760
        %v600 = vsub.f32 %v302, %v599
        %v601 = vand.u32 %v600, 4294901760
        %v602 = vsub.f32 %v600, %v601
        %v603 = vand.u32 %v602, 4294901760
        %604 = vmatmul.mubr.f32.gmra.mrb[0].mxu0 %v603
        %v605 = vpop.f32.mrb[0].mxu0
        %v606 = vadd.f32 %v241, %v605
        %v607 = vpop.f32.mrb[0].mxu0
        %608 = vmatprep.mubr.f32.mxu0 0.0
        %v609 = vand.u32 %v305, 4294901760
        %v610 = vsub.f32 %v305, %v609
        %v611 = vand.u32 %v610, 4294901760
        %v612 = vsub.f32 %v610, %v611
        %v613 = vand.u32 %v612, 4294901760
        %614 = vmatmul.mubr.f32.gmra.mrb[0].mxu0 %v613
        %v615 = vpop.f32.mrb[0].mxu0
        %v616 = vadd.f32 %v241, %v615
        %v617 = vpop.f32.mrb[0].mxu0
        %618 = vmatprep.mubr.f32.mxu0 0.0
        %v619 = vand.u32 %v308, 4294901760
        %v620 = vsub.f32 %v308, %v619
        %v621 = vand.u32 %v620, 4294901760
        %v622 = vsub.f32 %v620, %v621
        %v623 = vand.u32 %v622, 4294901760
        %624 = vmatmul.mubr.f32.gmra.mrb[0].mxu0 %v623
        %v625 = vpop.f32.mrb[0].mxu0
        %v626 = vadd.f32 %v241, %v625
        %v627 = vpop.f32.mrb[0].mxu0
        %628 = vmatprep.mubr.f32.mxu0 0.0
        %v629 = vand.u32 %v311, 4294901760
        %v630 = vsub.f32 %v311, %v629
        %v631 = vand.u32 %v630, 4294901760
        %v632 = vsub.f32 %v630, %v631
        %v633 = vand.u32 %v632, 4294901760
        %634 = vmatmul.mubr.f32.gmra.mrb[0].mxu0 %v633
        %v635 = vpop.f32.mrb[0].mxu0
        %v636 = vadd.f32 %v241, %v635
        %v637 = vpop.f32.mrb[0].mxu0
        %638 = vmatprep.mubr.f32.mxu0 0.0
        %v639 = vand.u32 %v314, 4294901760
        %v640 = vsub.f32 %v314, %v639
        %v641 = vand.u32 %v640, 4294901760
        %v642 = vsub.f32 %v640, %v641
        %v643 = vand.u32 %v642, 4294901760
        %644 = vmatmul.mubr.f32.gmra.mrb[0].mxu0 %v643
        %v645 = vpop.f32.mrb[0].mxu0
        %v646 = vadd.f32 %v241, %v645
        %v647 = vpop.f32.mrb[0].mxu0
        %648 = vmatprep.mubr.f32.mxu0 0.0
        %v649 = vand.u32 %v317, 4294901760
        %v650 = vsub.f32 %v317, %v649
        %v651 = vand.u32 %v650, 4294901760
        %v652 = vsub.f32 %v650, %v651
        %v653 = vand.u32 %v652, 4294901760
        %654 = vmatmul.mubr.f32.gmra.mrb[0].mxu0 %v653
        %v655 = vpop.f32.mrb[0].mxu0
        %v656 = vadd.f32 %v241, %v655
        %v657 = vpop.f32.mrb[0].mxu0
        %658 = vmatprep.mubr.f32.mxu0 0.0
        %v659 = vand.u32 %v320, 4294901760
        %v660 = vsub.f32 %v320, %v659
        %v661 = vand.u32 %v660, 4294901760
        %v662 = vsub.f32 %v660, %v661
        %v663 = vand.u32 %v662, 4294901760
        %664 = vmatmul.mubr.f32.gmra.mrb[0].mxu0 %v663
        %v665 = vpop.f32.mrb[0].mxu0
        %v666 = vadd.f32 %v241, %v665
        %v667 = vpop.f32.mrb[0].mxu0
        %668 = vmatprep.mubr.f32.mxu0 0.0
        %v669 = vand.u32 %v323, 4294901760
        %v670 = vsub.f32 %v323, %v669
        %v671 = vand.u32 %v670, 4294901760
        %v672 = vsub.f32 %v670, %v671
        %v673 = vand.u32 %v672, 4294901760
        %674 = vmatmul.mubr.f32.gmra.mrb[0].mxu0 %v673
        %v675 = vpop.f32.mrb[0].mxu0
        %v676 = vadd.f32 %v241, %v675
        %v677 = vpop.f32.mrb[0].mxu0
        %678 = vmatprep.mubr.f32.mxu0 0.0
        %v679 = vand.u32 %v326, 4294901760
        %v680 = vsub.f32 %v326, %v679
        %v681 = vand.u32 %v680, 4294901760
        %v682 = vsub.f32 %v680, %v681
        %v683 = vand.u32 %v682, 4294901760
        %684 = vmatmul.mubr.f32.gmra.mrb[0].mxu0 %v683
        %v685 = vpop.f32.mrb[0].mxu0
        %v686 = vadd.f32 %v241, %v685
        %v687 = vpop.f32.mrb[0].mxu0
        %688 = vmatprep.mubr.f32.mxu0 0.0
        %v689 = vand.u32 %v329, 4294901760
        %v690 = vsub.f32 %v329, %v689
        %v691 = vand.u32 %v690, 4294901760
        %v692 = vsub.f32 %v690, %v691
        %v693 = vand.u32 %v692, 4294901760
        %694 = vmatmul.mubr.f32.gmra.mrb[0].mxu0 %v693
        %v695 = vpop.f32.mrb[0].mxu0
        %v696 = vadd.f32 %v241, %v695
        %v697 = vpop.f32.mrb[0].mxu0
        %698 = vmatprep.mubr.f32.mxu0 0.0
        %v699 = vand.u32 %v332, 4294901760
        %v700 = vsub.f32 %v332, %v699
        %v701 = vand.u32 %v700, 4294901760
        %v702 = vsub.f32 %v700, %v701
        %v703 = vand.u32 %v702, 4294901760
        %704 = vmatmul.mubr.f32.gmra.mrb[0].mxu0 %v703
        %v705 = vpop.f32.mrb[0].mxu0
        %v706 = vadd.f32 %v241, %v705
        %v707 = vpop.f32.mrb[0].mxu0
        %708 = vmatprep.mubr.f32.mxu0 0.0
        %v709 = vand.u32 %v335, 4294901760
        %v710 = vsub.f32 %v335, %v709
        %v711 = vand.u32 %v710, 4294901760
        %v712 = vsub.f32 %v710, %v711
        %v713 = vand.u32 %v712, 4294901760
        %714 = vmatmul.mubr.f32.gmra.mrb[0].mxu0 %v713
        %v715 = vpop.f32.mrb[0].mxu0
        %v716 = vadd.f32 %v241, %v715
        %v717 = vpop.f32.mrb[0].mxu0
        %718 = vmatprep.mubr.f32.mxu0 0.0
        %v719 = vand.u32 %v338, 4294901760
        %v720 = vsub.f32 %v338, %v719
        %v721 = vand.u32 %v720, 4294901760
        %v722 = vsub.f32 %v720, %v721
        %v723 = vand.u32 %v722, 4294901760
        %724 = vmatmul.mubr.f32.gmra.mrb[0].mxu0 %v723
        %v725 = vpop.f32.mrb[0].mxu0
        %v726 = vadd.f32 %v241, %v725
        %v727 = vpop.f32.mrb[0].mxu0
        %728 = vdwg.mxu0
        %729 = vmatprep.subr.mxu0 0.0
        %v730 = vand.u32 %v232, 4294901760
        %v731 = vsub.f32 %v232, %v730
        %v732 = vand.u32 %v731, 4294901760
        %v733 = vsub.f32 %v731, %v732
        %v734 = vand.u32 %v733, 4294901760
        %735 = vmatpush1.msra.mxu0 %v734
        %736 = vmatprep.subr.mxu0 0.0
        %v737 = vand.u32 %v233, 4294901760
        %v738 = vsub.f32 %v233, %v737
        %v739 = vand.u32 %v738, 4294901760
        %v740 = vsub.f32 %v738, %v739
        %v741 = vand.u32 %v740, 4294901760
        %742 = vmatpush1.msra.mxu0 %v741
        %743 = vmatprep.subr.mxu0 0.0
        %v744 = vand.u32 %v234, 4294901760
        %v745 = vsub.f32 %v234, %v744
        %v746 = vand.u32 %v745, 4294901760
        %v747 = vsub.f32 %v745, %v746
        %v748 = vand.u32 %v747, 4294901760
        %749 = vmatpush1.msra.mxu0 %v748
        %750 = vmatprep.subr.mxu0 0.0
        %v751 = vand.u32 %v235, 4294901760
        %v752 = vsub.f32 %v235, %v751
        %v753 = vand.u32 %v752, 4294901760
        %v754 = vsub.f32 %v752, %v753
        %v755 = vand.u32 %v754, 4294901760
        %756 = vmatpush1.msra.mxu0 %v755
        %757 = vmatprep.subr.mxu0 0.0
        %758 = vmatpush1.msra.mxu0 0.0
        %759 = vmatprep.subr.mxu0 0.0
        %760 = vmatpush1.msra.mxu0 0.0
        %761 = vmatprep.subr.mxu0 0.0
        %762 = vmatpush1.msra.mxu0 0.0
        %763 = vmatprep.subr.mxu0 0.0
        %764 = vmatpush1.msra.mxu0 0.0
        %765 = vmatprep.subr.mxu0 0.0
        %766 = vmatpush1.msra.mxu0 0.0
        %767 = vmatprep.subr.mxu0 0.0
        %768 = vmatpush1.msra.mxu0 0.0
        %769 = vmatprep.subr.mxu0 0.0
        %770 = vmatpush1.msra.mxu0 0.0
        %771 = vmatprep.subr.mxu0 0.0
        %772 = vmatpush1.msra.mxu0 0.0
        %773 = vmatprep.subr.mxu0 0.0
        %774 = vmatpush1.msra.mxu0 0.0
        %775 = vmatprep.subr.mxu0 0.0
        %776 = vmatpush1.msra.mxu0 0.0
        %777 = vmatprep.subr.mxu0 0.0
        %778 = vmatpush1.msra.mxu0 0.0
        %779 = vmatprep.subr.mxu0 0.0
        %780 = vmatpush1.msra.mxu0 0.0
        %781 = vmatprep.subr.mxu0 0.0
        %782 = vmatpush1.msra.mxu0 0.0
        %783 = vmatprep.subr.mxu0 0.0
        %784 = vmatpush1.msra.mxu0 0.0
        %785 = vmatprep.subr.mxu0 0.0
        %786 = vmatpush1.msra.mxu0 0.0
        %787 = vmatprep.subr.mxu0 0.0
        %788 = vmatpush1.msra.mxu0 0.0
        %789 = vmatprep.subr.mxu0 0.0
        %790 = vmatpush1.msra.mxu0 0.0
        %791 = vmatprep.subr.mxu0 0.0
        %792 = vmatpush1.msra.mxu0 0.0
        %793 = vmatprep.subr.mxu0 0.0
        %794 = vmatpush1.msra.mxu0 0.0
        %795 = vmatprep.subr.mxu0 0.0
        %796 = vmatpush1.msra.mxu0 0.0
        %797 = vmatprep.subr.mxu0 0.0
        %798 = vmatpush1.msra.mxu0 0.0
        %799 = vmatprep.subr.mxu0 0.0
        %800 = vmatpush1.msra.mxu0 0.0
        %801 = vmatprep.subr.mxu0 0.0
        %802 = vmatpush1.msra.mxu0 0.0
        %803 = vmatprep.subr.mxu0 0.0
        %804 = vmatpush1.msra.mxu0 0.0
        %805 = vmatprep.subr.mxu0 0.0
        %806 = vmatpush1.msra.mxu0 0.0
        %807 = vmatprep.subr.mxu0 0.0
        %808 = vmatpush1.msra.mxu0 0.0
        %809 = vmatprep.subr.mxu0 0.0
        %810 = vmatpush1.msra.mxu0 0.0
        %811 = vmatprep.subr.mxu0 0.0
        %812 = vmatpush1.msra.mxu0 0.0
        %813 = vmatprep.mubr.f32.mxu0 0.0
        %v814 = vand.u32 %v245, 4294901760
        %815 = vmatmul.mubr.f32.gmra.mrb[0].mxu0 %v814
        %v816 = vpop.f32.mrb[0].mxu0
        %v817 = vadd.f32 %v416, %v816
        %v818 = vpop.f32.mrb[0].mxu0
        %819 = vmatprep.mubr.f32.mxu0 0.0
        %v820 = vand.u32 %v248, 4294901760
        %821 = vmatmul.mubr.f32.gmra.mrb[0].mxu0 %v820
        %v822 = vpop.f32.mrb[0].mxu0
        %v823 = vadd.f32 %v426, %v822
        %v824 = vpop.f32.mrb[0].mxu0
        %825 = vmatprep.mubr.f32.mxu0 0.0
        %v826 = vand.u32 %v251, 4294901760
        %827 = vmatmul.mubr.f32.gmra.mrb[0].mxu0 %v826
        %v828 = vpop.f32.mrb[0].mxu0
        %v829 = vadd.f32 %v436, %v828
        %v830 = vpop.f32.mrb[0].mxu0
        %831 = vmatprep.mubr.f32.mxu0 0.0
        %v832 = vand.u32 %v254, 4294901760
        %833 = vmatmul.mubr.f32.gmra.mrb[0].mxu0 %v832
        %v834 = vpop.f32.mrb[0].mxu0
        %v835 = vadd.f32 %v446, %v834
        %v836 = vpop.f32.mrb[0].mxu0
        %837 = vmatprep.mubr.f32.mxu0 0.0
        %v838 = vand.u32 %v257, 4294901760
        %839 = vmatmul.mubr.f32.gmra.mrb[0].mxu0 %v838
        %v840 = vpop.f32.mrb[0].mxu0
        %v841 = vadd.f32 %v456, %v840
        %v842 = vpop.f32.mrb[0].mxu0
        %843 = vmatprep.mubr.f32.mxu0 0.0
        %v844 = vand.u32 %v260, 4294901760
        %845 = vmatmul.mubr.f32.gmra.mrb[0].mxu0 %v844
        %v846 = vpop.f32.mrb[0].mxu0
        %v847 = vadd.f32 %v466, %v846
        %v848 = vpop.f32.mrb[0].mxu0
        %849 = vmatprep.mubr.f32.mxu0 0.0
        %v850 = vand.u32 %v263, 4294901760
        %851 = vmatmul.mubr.f32.gmra.mrb[0].mxu0 %v850
        %v852 = vpop.f32.mrb[0].mxu0
        %v853 = vadd.f32 %v476, %v852
        %v854 = vpop.f32.mrb[0].mxu0
        %855 = vmatprep.mubr.f32.mxu0 0.0
        %v856 = vand.u32 %v266, 4294901760
        %857 = vmatmul.mubr.f32.gmra.mrb[0].mxu0 %v856
        %v858 = vpop.f32.mrb[0].mxu0
        %v859 = vadd.f32 %v486, %v858
        %v860 = vpop.f32.mrb[0].mxu0
        %861 = vmatprep.mubr.f32.mxu0 0.0
        %v862 = vand.u32 %v269, 4294901760
        %863 = vmatmul.mubr.f32.gmra.mrb[0].mxu0 %v862
        %v864 = vpop.f32.mrb[0].mxu0
        %v865 = vadd.f32 %v496, %v864
        %v866 = vpop.f32.mrb[0].mxu0
        %867 = vmatprep.mubr.f32.mxu0 0.0
        %v868 = vand.u32 %v272, 4294901760
        %869 = vmatmul.mubr.f32.gmra.mrb[0].mxu0 %v868
        %v870 = vpop.f32.mrb[0].mxu0
        %v871 = vadd.f32 %v506, %v870
        %v872 = vpop.f32.mrb[0].mxu0
        %873 = vmatprep.mubr.f32.mxu0 0.0
        %v874 = vand.u32 %v275, 4294901760
        %875 = vmatmul.mubr.f32.gmra.mrb[0].mxu0 %v874
        %v876 = vpop.f32.mrb[0].mxu0
        %v877 = vadd.f32 %v516, %v876
        %v878 = vpop.f32.mrb[0].mxu0
        %879 = vmatprep.mubr.f32.mxu0 0.0
        %v880 = vand.u32 %v278, 4294901760
        %881 = vmatmul.mubr.f32.gmra.mrb[0].mxu0 %v880
        %v882 = vpop.f32.mrb[0].mxu0
        %v883 = vadd.f32 %v526, %v882
        %v884 = vpop.f32.mrb[0].mxu0
        %885 = vmatprep.mubr.f32.mxu0 0.0
        %v886 = vand.u32 %v281, 4294901760
        %887 = vmatmul.mubr.f32.gmra.mrb[0].mxu0 %v886
        %v888 = vpop.f32.mrb[0].mxu0
        %v889 = vadd.f32 %v536, %v888
        %v890 = vpop.f32.mrb[0].mxu0
        %891 = vmatprep.mubr.f32.mxu0 0.0
        %v892 = vand.u32 %v284, 4294901760
        %893 = vmatmul.mubr.f32.gmra.mrb[0].mxu0 %v892
        %v894 = vpop.f32.mrb[0].mxu0
        %v895 = vadd.f32 %v546, %v894
        %v896 = vpop.f32.mrb[0].mxu0
        %897 = vmatprep.mubr.f32.mxu0 0.0
        %v898 = vand.u32 %v287, 4294901760
        %899 = vmatmul.mubr.f32.gmra.mrb[0].mxu0 %v898
        %v900 = vpop.f32.mrb[0].mxu0
        %v901 = vadd.f32 %v556, %v900
        %v902 = vpop.f32.mrb[0].mxu0
        %903 = vmatprep.mubr.f32.mxu0 0.0
        %v904 = vand.u32 %v290, 4294901760
        %905 = vmatmul.mubr.f32.gmra.mrb[0].mxu0 %v904
        %v906 = vpop.f32.mrb[0].mxu0
        %v907 = vadd.f32 %v566, %v906
        %v908 = vpop.f32.mrb[0].mxu0
        %909 = vmatprep.mubr.f32.mxu0 0.0
        %v910 = vand.u32 %v293, 4294901760
        %911 = vmatmul.mubr.f32.gmra.mrb[0].mxu0 %v910
        %v912 = vpop.f32.mrb[0].mxu0
        %v913 = vadd.f32 %v576, %v912
        %v914 = vpop.f32.mrb[0].mxu0
        %915 = vmatprep.mubr.f32.mxu0 0.0
        %v916 = vand.u32 %v296, 4294901760
        %917 = vmatmul.mubr.f32.gmra.mrb[0].mxu0 %v916
        %v918 = vpop.f32.mrb[0].mxu0
        %v919 = vadd.f32 %v586, %v918
        %v920 = vpop.f32.mrb[0].mxu0
        %921 = vmatprep.mubr.f32.mxu0 0.0
        %v922 = vand.u32 %v299, 4294901760
        %923 = vmatmul.mubr.f32.gmra.mrb[0].mxu0 %v922
        %v924 = vpop.f32.mrb[0].mxu0
        %v925 = vadd.f32 %v596, %v924
        %v926 = vpop.f32.mrb[0].mxu0
        %927 = vmatprep.mubr.f32.mxu0 0.0
        %v928 = vand.u32 %v302, 4294901760
        %929 = vmatmul.mubr.f32.gmra.mrb[0].mxu0 %v928
        %v930 = vpop.f32.mrb[0].mxu0
        %v931 = vadd.f32 %v606, %v930
        %v932 = vpop.f32.mrb[0].mxu0
        %933 = vmatprep.mubr.f32.mxu0 0.0
        %v934 = vand.u32 %v305, 4294901760
        %935 = vmatmul.mubr.f32.gmra.mrb[0].mxu0 %v934
        %v936 = vpop.f32.mrb[0].mxu0
        %v937 = vadd.f32 %v616, %v936
        %v938 = vpop.f32.mrb[0].mxu0
        %939 = vmatprep.mubr.f32.mxu0 0.0
        %v940 = vand.u32 %v308, 4294901760
        %941 = vmatmul.mubr.f32.gmra.mrb[0].mxu0 %v940
        %v942 = vpop.f32.mrb[0].mxu0
        %v943 = vadd.f32 %v626, %v942
        %v944 = vpop.f32.mrb[0].mxu0
        %945 = vmatprep.mubr.f32.mxu0 0.0
        %v946 = vand.u32 %v311, 4294901760
        %947 = vmatmul.mubr.f32.gmra.mrb[0].mxu0 %v946
        %v948 = vpop.f32.mrb[0].mxu0
        %v949 = vadd.f32 %v636, %v948
        %v950 = vpop.f32.mrb[0].mxu0
        %951 = vmatprep.mubr.f32.mxu0 0.0
        %v952 = vand.u32 %v314, 4294901760
        %953 = vmatmul.mubr.f32.gmra.mrb[0].mxu0 %v952
        %v954 = vpop.f32.mrb[0].mxu0
        %v955 = vadd.f32 %v646, %v954
        %v956 = vpop.f32.mrb[0].mxu0
        %957 = vmatprep.mubr.f32.mxu0 0.0
        %v958 = vand.u32 %v317, 4294901760
        %959 = vmatmul.mubr.f32.gmra.mrb[0].mxu0 %v958
        %v960 = vpop.f32.mrb[0].mxu0
        %v961 = vadd.f32 %v656, %v960
        %v962 = vpop.f32.mrb[0].mxu0
        %963 = vmatprep.mubr.f32.mxu0 0.0
        %v964 = vand.u32 %v320, 4294901760
        %965 = vmatmul.mubr.f32.gmra.mrb[0].mxu0 %v964
        %v966 = vpop.f32.mrb[0].mxu0
        %v967 = vadd.f32 %v666, %v966
        %v968 = vpop.f32.mrb[0].mxu0
        %969 = vmatprep.mubr.f32.mxu0 0.0
        %v970 = vand.u32 %v323, 4294901760
        %971 = vmatmul.mubr.f32.gmra.mrb[0].mxu0 %v970
        %v972 = vpop.f32.mrb[0].mxu0
        %v973 = vadd.f32 %v676, %v972
        %v974 = vpop.f32.mrb[0].mxu0
        %975 = vmatprep.mubr.f32.mxu0 0.0
        %v976 = vand.u32 %v326, 4294901760
        %977 = vmatmul.mubr.f32.gmra.mrb[0].mxu0 %v976
        %v978 = vpop.f32.mrb[0].mxu0
        %v979 = vadd.f32 %v686, %v978
        %v980 = vpop.f32.mrb[0].mxu0
        %981 = vmatprep.mubr.f32.mxu0 0.0
        %v982 = vand.u32 %v329, 4294901760
        %983 = vmatmul.mubr.f32.gmra.mrb[0].mxu0 %v982
        %v984 = vpop.f32.mrb[0].mxu0
        %v985 = vadd.f32 %v696, %v984
        %v986 = vpop.f32.mrb[0].mxu0
        %987 = vmatprep.mubr.f32.mxu0 0.0
        %v988 = vand.u32 %v332, 4294901760
        %989 = vmatmul.mubr.f32.gmra.mrb[0].mxu0 %v988
        %v990 = vpop.f32.mrb[0].mxu0
        %v991 = vadd.f32 %v706, %v990
        %v992 = vpop.f32.mrb[0].mxu0
        %993 = vmatprep.mubr.f32.mxu0 0.0
        %v994 = vand.u32 %v335, 4294901760
        %995 = vmatmul.mubr.f32.gmra.mrb[0].mxu0 %v994
        %v996 = vpop.f32.mrb[0].mxu0
        %v997 = vadd.f32 %v716, %v996
        %v998 = vpop.f32.mrb[0].mxu0
        %999 = vmatprep.mubr.f32.mxu0 0.0
        %v1000 = vand.u32 %v338, 4294901760
        %1001 = vmatmul.mubr.f32.gmra.mrb[0].mxu0 %v1000
        %v1002 = vpop.f32.mrb[0].mxu0
        %v1003 = vadd.f32 %v726, %v1002
        %v1004 = vpop.f32.mrb[0].mxu0
        %1005 = vdwg.mxu0
        %1006 = vmatprep.subr.mxu0 0.0
        %v1007 = vand.u32 %v232, 4294901760
        %v1008 = vsub.f32 %v232, %v1007
        %1009 = vmatpush1.msra.mxu0 %v1008
        %1010 = vmatprep.subr.mxu0 0.0
        %v1011 = vand.u32 %v233, 4294901760
        %v1012 = vsub.f32 %v233, %v1011
        %1013 = vmatpush1.msra.mxu0 %v1012
        %1014 = vmatprep.subr.mxu0 0.0
        %v1015 = vand.u32 %v234, 4294901760
        %v1016 = vsub.f32 %v234, %v1015
        %1017 = vmatpush1.msra.mxu0 %v1016
        %1018 = vmatprep.subr.mxu0 0.0
        %v1019 = vand.u32 %v235, 4294901760
        %v1020 = vsub.f32 %v235, %v1019
        %1021 = vmatpush1.msra.mxu0 %v1020
        %1022 = vmatprep.subr.mxu0 0.0
        %1023 = vmatpush1.msra.mxu0 0.0
        %1024 = vmatprep.subr.mxu0 0.0
        %1025 = vmatpush1.msra.mxu0 0.0
        %1026 = vmatprep.subr.mxu0 0.0
        %1027 = vmatpush1.msra.mxu0 0.0
        %1028 = vmatprep.subr.mxu0 0.0
        %1029 = vmatpush1.msra.mxu0 0.0
        %1030 = vmatprep.subr.mxu0 0.0
        %1031 = vmatpush1.msra.mxu0 0.0
        %1032 = vmatprep.subr.mxu0 0.0
        %1033 = vmatpush1.msra.mxu0 0.0
        %1034 = vmatprep.subr.mxu0 0.0
        %1035 = vmatpush1.msra.mxu0 0.0
        %1036 = vmatprep.subr.mxu0 0.0
        %1037 = vmatpush1.msra.mxu0 0.0
        %1038 = vmatprep.subr.mxu0 0.0
        %1039 = vmatpush1.msra.mxu0 0.0
        %1040 = vmatprep.subr.mxu0 0.0
        %1041 = vmatpush1.msra.mxu0 0.0
        %1042 = vmatprep.subr.mxu0 0.0
        %1043 = vmatpush1.msra.mxu0 0.0
        %1044 = vmatprep.subr.mxu0 0.0
        %1045 = vmatpush1.msra.mxu0 0.0
        %1046 = vmatprep.subr.mxu0 0.0
        %1047 = vmatpush1.msra.mxu0 0.0
        %1048 = vmatprep.subr.mxu0 0.0
        %1049 = vmatpush1.msra.mxu0 0.0
        %1050 = vmatprep.subr.mxu0 0.0
        %1051 = vmatpush1.msra.mxu0 0.0
        %1052 = vmatprep.subr.mxu0 0.0
        %1053 = vmatpush1.msra.mxu0 0.0
        %1054 = vmatprep.subr.mxu0 0.0
        %1055 = vmatpush1.msra.mxu0 0.0
        %1056 = vmatprep.subr.mxu0 0.0
        %1057 = vmatpush1.msra.mxu0 0.0
        %1058 = vmatprep.subr.mxu0 0.0
        %1059 = vmatpush1.msra.mxu0 0.0
        %1060 = vmatprep.subr.mxu0 0.0
        %1061 = vmatpush1.msra.mxu0 0.0
        %1062 = vmatprep.subr.mxu0 0.0
        %1063 = vmatpush1.msra.mxu0 0.0
        %1064 = vmatprep.subr.mxu0 0.0
        %1065 = vmatpush1.msra.mxu0 0.0
        %1066 = vmatprep.subr.mxu0 0.0
        %1067 = vmatpush1.msra.mxu0 0.0
        %1068 = vmatprep.subr.mxu0 0.0
        %1069 = vmatpush1.msra.mxu0 0.0
        %1070 = vmatprep.subr.mxu0 0.0
        %1071 = vmatpush1.msra.mxu0 0.0
        %1072 = vmatprep.subr.mxu0 0.0
        %1073 = vmatpush1.msra.mxu0 0.0
        %1074 = vmatprep.subr.mxu0 0.0
        %1075 = vmatpush1.msra.mxu0 0.0
        %1076 = vmatprep.subr.mxu0 0.0
        %1077 = vmatpush1.msra.mxu0 0.0
        %1078 = vmatprep.mubr.f32.mxu0 0.0
        %v1079 = vand.u32 %v245, 4294901760
        %v1080 = vsub.f32 %v245, %v1079
        %1081 = vmatmul.mubr.f32.gmra.mrb[0].mxu0 %v1080
        %v1082 = vpop.f32.mrb[0].mxu0
        %v1083 = vadd.f32 %v817, %v1082
        %v1084 = vpop.f32.mrb[0].mxu0
        %1085 = vmatprep.mubr.f32.mxu0 0.0
        %v1086 = vand.u32 %v248, 4294901760
        %v1087 = vsub.f32 %v248, %v1086
        %1088 = vmatmul.mubr.f32.gmra.mrb[0].mxu0 %v1087
        %v1089 = vpop.f32.mrb[0].mxu0
        %v1090 = vadd.f32 %v823, %v1089
        %v1091 = vpop.f32.mrb[0].mxu0
        %1092 = vmatprep.mubr.f32.mxu0 0.0
        %v1093 = vand.u32 %v251, 4294901760
        %v1094 = vsub.f32 %v251, %v1093
        %1095 = vmatmul.mubr.f32.gmra.mrb[0].mxu0 %v1094
        %v1096 = vpop.f32.mrb[0].mxu0
        %v1097 = vadd.f32 %v829, %v1096
        %v1098 = vpop.f32.mrb[0].mxu0
        %1099 = vmatprep.mubr.f32.mxu0 0.0
        %v1100 = vand.u32 %v254, 4294901760
        %v1101 = vsub.f32 %v254, %v1100
        %1102 = vmatmul.mubr.f32.gmra.mrb[0].mxu0 %v1101
        %v1103 = vpop.f32.mrb[0].mxu0
        %v1104 = vadd.f32 %v835, %v1103
        %v1105 = vpop.f32.mrb[0].mxu0
        %1106 = vmatprep.mubr.f32.mxu0 0.0
        %v1107 = vand.u32 %v257, 4294901760
        %v1108 = vsub.f32 %v257, %v1107
        %1109 = vmatmul.mubr.f32.gmra.mrb[0].mxu0 %v1108
        %v1110 = vpop.f32.mrb[0].mxu0
        %v1111 = vadd.f32 %v841, %v1110
        %v1112 = vpop.f32.mrb[0].mxu0
        %1113 = vmatprep.mubr.f32.mxu0 0.0
        %v1114 = vand.u32 %v260, 4294901760
        %v1115 = vsub.f32 %v260, %v1114
        %1116 = vmatmul.mubr.f32.gmra.mrb[0].mxu0 %v1115
        %v1117 = vpop.f32.mrb[0].mxu0
        %v1118 = vadd.f32 %v847, %v1117
        %v1119 = vpop.f32.mrb[0].mxu0
        %1120 = vmatprep.mubr.f32.mxu0 0.0
        %v1121 = vand.u32 %v263, 4294901760
        %v1122 = vsub.f32 %v263, %v1121
        %1123 = vmatmul.mubr.f32.gmra.mrb[0].mxu0 %v1122
        %v1124 = vpop.f32.mrb[0].mxu0
        %v1125 = vadd.f32 %v853, %v1124
        %v1126 = vpop.f32.mrb[0].mxu0
        %1127 = vmatprep.mubr.f32.mxu0 0.0
        %v1128 = vand.u32 %v266, 4294901760
        %v1129 = vsub.f32 %v266, %v1128
        %1130 = vmatmul.mubr.f32.gmra.mrb[0].mxu0 %v1129
        %v1131 = vpop.f32.mrb[0].mxu0
        %v1132 = vadd.f32 %v859, %v1131
        %v1133 = vpop.f32.mrb[0].mxu0
        %1134 = vmatprep.mubr.f32.mxu0 0.0
        %v1135 = vand.u32 %v269, 4294901760
        %v1136 = vsub.f32 %v269, %v1135
        %1137 = vmatmul.mubr.f32.gmra.mrb[0].mxu0 %v1136
        %v1138 = vpop.f32.mrb[0].mxu0
        %v1139 = vadd.f32 %v865, %v1138
        %v1140 = vpop.f32.mrb[0].mxu0
        %1141 = vmatprep.mubr.f32.mxu0 0.0
        %v1142 = vand.u32 %v272, 4294901760
        %v1143 = vsub.f32 %v272, %v1142
        %1144 = vmatmul.mubr.f32.gmra.mrb[0].mxu0 %v1143
        %v1145 = vpop.f32.mrb[0].mxu0
        %v1146 = vadd.f32 %v871, %v1145
        %v1147 = vpop.f32.mrb[0].mxu0
        %1148 = vmatprep.mubr.f32.mxu0 0.0
        %v1149 = vand.u32 %v275, 4294901760
        %v1150 = vsub.f32 %v275, %v1149
        %1151 = vmatmul.mubr.f32.gmra.mrb[0].mxu0 %v1150
        %v1152 = vpop.f32.mrb[0].mxu0
        %v1153 = vadd.f32 %v877, %v1152
        %v1154 = vpop.f32.mrb[0].mxu0
        %1155 = vmatprep.mubr.f32.mxu0 0.0
        %v1156 = vand.u32 %v278, 4294901760
        %v1157 = vsub.f32 %v278, %v1156
        %1158 = vmatmul.mubr.f32.gmra.mrb[0].mxu0 %v1157
        %v1159 = vpop.f32.mrb[0].mxu0
        %v1160 = vadd.f32 %v883, %v1159
        %v1161 = vpop.f32.mrb[0].mxu0
        %1162 = vmatprep.mubr.f32.mxu0 0.0
        %v1163 = vand.u32 %v281, 4294901760
        %v1164 = vsub.f32 %v281, %v1163
        %1165 = vmatmul.mubr.f32.gmra.mrb[0].mxu0 %v1164
        %v1166 = vpop.f32.mrb[0].mxu0
        %v1167 = vadd.f32 %v889, %v1166
        %v1168 = vpop.f32.mrb[0].mxu0
        %1169 = vmatprep.mubr.f32.mxu0 0.0
        %v1170 = vand.u32 %v284, 4294901760
        %v1171 = vsub.f32 %v284, %v1170
        %1172 = vmatmul.mubr.f32.gmra.mrb[0].mxu0 %v1171
        %v1173 = vpop.f32.mrb[0].mxu0
        %v1174 = vadd.f32 %v895, %v1173
        %v1175 = vpop.f32.mrb[0].mxu0
        %1176 = vmatprep.mubr.f32.mxu0 0.0
        %v1177 = vand.u32 %v287, 4294901760
        %v1178 = vsub.f32 %v287, %v1177
        %1179 = vmatmul.mubr.f32.gmra.mrb[0].mxu0 %v1178
        %v1180 = vpop.f32.mrb[0].mxu0
        %v1181 = vadd.f32 %v901, %v1180
        %v1182 = vpop.f32.mrb[0].mxu0
        %1183 = vmatprep.mubr.f32.mxu0 0.0
        %v1184 = vand.u32 %v290, 4294901760
        %v1185 = vsub.f32 %v290, %v1184
        %1186 = vmatmul.mubr.f32.gmra.mrb[0].mxu0 %v1185
        %v1187 = vpop.f32.mrb[0].mxu0
        %v1188 = vadd.f32 %v907, %v1187
        %v1189 = vpop.f32.mrb[0].mxu0
        %1190 = vmatprep.mubr.f32.mxu0 0.0
        %v1191 = vand.u32 %v293, 4294901760
        %v1192 = vsub.f32 %v293, %v1191
        %1193 = vmatmul.mubr.f32.gmra.mrb[0].mxu0 %v1192
        %v1194 = vpop.f32.mrb[0].mxu0
        %v1195 = vadd.f32 %v913, %v1194
        %v1196 = vpop.f32.mrb[0].mxu0
        %1197 = vmatprep.mubr.f32.mxu0 0.0
        %v1198 = vand.u32 %v296, 4294901760
        %v1199 = vsub.f32 %v296, %v1198
        %1200 = vmatmul.mubr.f32.gmra.mrb[0].mxu0 %v1199
        %v1201 = vpop.f32.mrb[0].mxu0
        %v1202 = vadd.f32 %v919, %v1201
        %v1203 = vpop.f32.mrb[0].mxu0
        %1204 = vmatprep.mubr.f32.mxu0 0.0
        %v1205 = vand.u32 %v299, 4294901760
        %v1206 = vsub.f32 %v299, %v1205
        %1207 = vmatmul.mubr.f32.gmra.mrb[0].mxu0 %v1206
        %v1208 = vpop.f32.mrb[0].mxu0
        %v1209 = vadd.f32 %v925, %v1208
        %v1210 = vpop.f32.mrb[0].mxu0
        %1211 = vmatprep.mubr.f32.mxu0 0.0
        %v1212 = vand.u32 %v302, 4294901760
        %v1213 = vsub.f32 %v302, %v1212
        %1214 = vmatmul.mubr.f32.gmra.mrb[0].mxu0 %v1213
        %v1215 = vpop.f32.mrb[0].mxu0
        %v1216 = vadd.f32 %v931, %v1215
        %v1217 = vpop.f32.mrb[0].mxu0
        %1218 = vmatprep.mubr.f32.mxu0 0.0
        %v1219 = vand.u32 %v305, 4294901760
        %v1220 = vsub.f32 %v305, %v1219
        %1221 = vmatmul.mubr.f32.gmra.mrb[0].mxu0 %v1220
        %v1222 = vpop.f32.mrb[0].mxu0
        %v1223 = vadd.f32 %v937, %v1222
        %v1224 = vpop.f32.mrb[0].mxu0
        %1225 = vmatprep.mubr.f32.mxu0 0.0
        %v1226 = vand.u32 %v308, 4294901760
        %v1227 = vsub.f32 %v308, %v1226
        %1228 = vmatmul.mubr.f32.gmra.mrb[0].mxu0 %v1227
        %v1229 = vpop.f32.mrb[0].mxu0
        %v1230 = vadd.f32 %v943, %v1229
        %v1231 = vpop.f32.mrb[0].mxu0
        %1232 = vmatprep.mubr.f32.mxu0 0.0
        %v1233 = vand.u32 %v311, 4294901760
        %v1234 = vsub.f32 %v311, %v1233
        %1235 = vmatmul.mubr.f32.gmra.mrb[0].mxu0 %v1234
        %v1236 = vpop.f32.mrb[0].mxu0
        %v1237 = vadd.f32 %v949, %v1236
        %v1238 = vpop.f32.mrb[0].mxu0
        %1239 = vmatprep.mubr.f32.mxu0 0.0
        %v1240 = vand.u32 %v314, 4294901760
        %v1241 = vsub.f32 %v314, %v1240
        %1242 = vmatmul.mubr.f32.gmra.mrb[0].mxu0 %v1241
        %v1243 = vpop.f32.mrb[0].mxu0
        %v1244 = vadd.f32 %v955, %v1243
        %v1245 = vpop.f32.mrb[0].mxu0
        %1246 = vmatprep.mubr.f32.mxu0 0.0
        %v1247 = vand.u32 %v317, 4294901760
        %v1248 = vsub.f32 %v317, %v1247
        %1249 = vmatmul.mubr.f32.gmra.mrb[0].mxu0 %v1248
        %v1250 = vpop.f32.mrb[0].mxu0
        %v1251 = vadd.f32 %v961, %v1250
        %v1252 = vpop.f32.mrb[0].mxu0
        %1253 = vmatprep.mubr.f32.mxu0 0.0
        %v1254 = vand.u32 %v320, 4294901760
        %v1255 = vsub.f32 %v320, %v1254
        %1256 = vmatmul.mubr.f32.gmra.mrb[0].mxu0 %v1255
        %v1257 = vpop.f32.mrb[0].mxu0
        %v1258 = vadd.f32 %v967, %v1257
        %v1259 = vpop.f32.mrb[0].mxu0
        %1260 = vmatprep.mubr.f32.mxu0 0.0
        %v1261 = vand.u32 %v323, 4294901760
        %v1262 = vsub.f32 %v323, %v1261
        %1263 = vmatmul.mubr.f32.gmra.mrb[0].mxu0 %v1262
        %v1264 = vpop.f32.mrb[0].mxu0
        %v1265 = vadd.f32 %v973, %v1264
        %v1266 = vpop.f32.mrb[0].mxu0
        %1267 = vmatprep.mubr.f32.mxu0 0.0
        %v1268 = vand.u32 %v326, 4294901760
        %v1269 = vsub.f32 %v326, %v1268
        %1270 = vmatmul.mubr.f32.gmra.mrb[0].mxu0 %v1269
        %v1271 = vpop.f32.mrb[0].mxu0
        %v1272 = vadd.f32 %v979, %v1271
        %v1273 = vpop.f32.mrb[0].mxu0
        %1274 = vmatprep.mubr.f32.mxu0 0.0
        %v1275 = vand.u32 %v329, 4294901760
        %v1276 = vsub.f32 %v329, %v1275
        %1277 = vmatmul.mubr.f32.gmra.mrb[0].mxu0 %v1276
        %v1278 = vpop.f32.mrb[0].mxu0
        %v1279 = vadd.f32 %v985, %v1278
        %v1280 = vpop.f32.mrb[0].mxu0
        %1281 = vmatprep.mubr.f32.mxu0 0.0
        %v1282 = vand.u32 %v332, 4294901760
        %v1283 = vsub.f32 %v332, %v1282
        %1284 = vmatmul.mubr.f32.gmra.mrb[0].mxu0 %v1283
        %v1285 = vpop.f32.mrb[0].mxu0
        %v1286 = vadd.f32 %v991, %v1285
        %v1287 = vpop.f32.mrb[0].mxu0
        %1288 = vmatprep.mubr.f32.mxu0 0.0
        %v1289 = vand.u32 %v335, 4294901760
        %v1290 = vsub.f32 %v335, %v1289
        %1291 = vmatmul.mubr.f32.gmra.mrb[0].mxu0 %v1290
        %v1292 = vpop.f32.mrb[0].mxu0
        %v1293 = vadd.f32 %v997, %v1292
        %v1294 = vpop.f32.mrb[0].mxu0
        %1295 = vmatprep.mubr.f32.mxu0 0.0
        %v1296 = vand.u32 %v338, 4294901760
        %v1297 = vsub.f32 %v338, %v1296
        %1298 = vmatmul.mubr.f32.gmra.mrb[0].mxu0 %v1297
        %v1299 = vpop.f32.mrb[0].mxu0
        %v1300 = vadd.f32 %v1003, %v1299
        %v1301 = vpop.f32.mrb[0].mxu0
        %1302 = vdwg.mxu0
        %1303 = vmatprep.subr.mxu0 0.0
        %v1304 = vand.u32 %v232, 4294901760
        %1305 = vmatpush1.msra.mxu0 %v1304
        %1306 = vmatprep.subr.mxu0 0.0
        %v1307 = vand.u32 %v233, 4294901760
        %1308 = vmatpush1.msra.mxu0 %v1307
        %1309 = vmatprep.subr.mxu0 0.0
        %v1310 = vand.u32 %v234, 4294901760
        %1311 = vmatpush1.msra.mxu0 %v1310
        %1312 = vmatprep.subr.mxu0 0.0
        %v1313 = vand.u32 %v235, 4294901760
        %1314 = vmatpush1.msra.mxu0 %v1313
        %1315 = vmatprep.subr.mxu0 0.0
        %1316 = vmatpush1.msra.mxu0 0.0
        %1317 = vmatprep.subr.mxu0 0.0
        %1318 = vmatpush1.msra.mxu0 0.0
        %1319 = vmatprep.subr.mxu0 0.0
        %1320 = vmatpush1.msra.mxu0 0.0
        %1321 = vmatprep.subr.mxu0 0.0
        %1322 = vmatpush1.msra.mxu0 0.0
        %1323 = vmatprep.subr.mxu0 0.0
        %1324 = vmatpush1.msra.mxu0 0.0
        %1325 = vmatprep.subr.mxu0 0.0
        %1326 = vmatpush1.msra.mxu0 0.0
        %1327 = vmatprep.subr.mxu0 0.0
        %1328 = vmatpush1.msra.mxu0 0.0
        %1329 = vmatprep.subr.mxu0 0.0
        %1330 = vmatpush1.msra.mxu0 0.0
        %1331 = vmatprep.subr.mxu0 0.0
        %1332 = vmatpush1.msra.mxu0 0.0
        %1333 = vmatprep.subr.mxu0 0.0
        %1334 = vmatpush1.msra.mxu0 0.0
        %1335 = vmatprep.subr.mxu0 0.0
        %1336 = vmatpush1.msra.mxu0 0.0
        %1337 = vmatprep.subr.mxu0 0.0
        %1338 = vmatpush1.msra.mxu0 0.0
        %1339 = vmatprep.subr.mxu0 0.0
        %1340 = vmatpush1.msra.mxu0 0.0
        %1341 = vmatprep.subr.mxu0 0.0
        %1342 = vmatpush1.msra.mxu0 0.0
        %1343 = vmatprep.subr.mxu0 0.0
        %1344 = vmatpush1.msra.mxu0 0.0
        %1345 = vmatprep.subr.mxu0 0.0
        %1346 = vmatpush1.msra.mxu0 0.0
        %1347 = vmatprep.subr.mxu0 0.0
        %1348 = vmatpush1.msra.mxu0 0.0
        %1349 = vmatprep.subr.mxu0 0.0
        %1350 = vmatpush1.msra.mxu0 0.0
        %1351 = vmatprep.subr.mxu0 0.0
        %1352 = vmatpush1.msra.mxu0 0.0
        %1353 = vmatprep.subr.mxu0 0.0
        %1354 = vmatpush1.msra.mxu0 0.0
        %1355 = vmatprep.subr.mxu0 0.0
        %1356 = vmatpush1.msra.mxu0 0.0
        %1357 = vmatprep.subr.mxu0 0.0
        %1358 = vmatpush1.msra.mxu0 0.0
        %1359 = vmatprep.subr.mxu0 0.0
        %1360 = vmatpush1.msra.mxu0 0.0
        %1361 = vmatprep.subr.mxu0 0.0
        %1362 = vmatpush1.msra.mxu0 0.0
        %1363 = vmatprep.subr.mxu0 0.0
        %1364 = vmatpush1.msra.mxu0 0.0
        %1365 = vmatprep.subr.mxu0 0.0
        %1366 = vmatpush1.msra.mxu0 0.0
        %1367 = vmatprep.subr.mxu0 0.0
        %1368 = vmatpush1.msra.mxu0 0.0
        %1369 = vmatprep.subr.mxu0 0.0
        %1370 = vmatpush1.msra.mxu0 0.0
        %1371 = vmatprep.mubr.f32.mxu0 0.0
        %v1372 = vand.u32 %v245, 4294901760
        %v1373 = vsub.f32 %v245, %v1372
        %v1374 = vand.u32 %v1373, 4294901760
        %1375 = vmatmul.mubr.f32.gmra.mrb[0].mxu0 %v1374
        %v1376 = vpop.f32.mrb[0].mxu0
        %v1377 = vadd.f32 %v1083, %v1376
        %v1378 = vpop.f32.mrb[0].mxu0
        %1379 = vmatprep.mubr.f32.mxu0 0.0
        %v1380 = vand.u32 %v248, 4294901760
        %v1381 = vsub.f32 %v248, %v1380
        %v1382 = vand.u32 %v1381, 4294901760
        %1383 = vmatmul.mubr.f32.gmra.mrb[0].mxu0 %v1382
        %v1384 = vpop.f32.mrb[0].mxu0
        %v1385 = vadd.f32 %v1090, %v1384
        %v1386 = vpop.f32.mrb[0].mxu0
        %1387 = vmatprep.mubr.f32.mxu0 0.0
        %v1388 = vand.u32 %v251, 4294901760
        %v1389 = vsub.f32 %v251, %v1388
        %v1390 = vand.u32 %v1389, 4294901760
        %1391 = vmatmul.mubr.f32.gmra.mrb[0].mxu0 %v1390
        %v1392 = vpop.f32.mrb[0].mxu0
        %v1393 = vadd.f32 %v1097, %v1392
        %v1394 = vpop.f32.mrb[0].mxu0
        %1395 = vmatprep.mubr.f32.mxu0 0.0
        %v1396 = vand.u32 %v254, 4294901760
        %v1397 = vsub.f32 %v254, %v1396
        %v1398 = vand.u32 %v1397, 4294901760
        %1399 = vmatmul.mubr.f32.gmra.mrb[0].mxu0 %v1398
        %v1400 = vpop.f32.mrb[0].mxu0
        %v1401 = vadd.f32 %v1104, %v1400
        %v1402 = vpop.f32.mrb[0].mxu0
        %1403 = vmatprep.mubr.f32.mxu0 0.0
        %v1404 = vand.u32 %v257, 4294901760
        %v1405 = vsub.f32 %v257, %v1404
        %v1406 = vand.u32 %v1405, 4294901760
        %1407 = vmatmul.mubr.f32.gmra.mrb[0].mxu0 %v1406
        %v1408 = vpop.f32.mrb[0].mxu0
        %v1409 = vadd.f32 %v1111, %v1408
        %v1410 = vpop.f32.mrb[0].mxu0
        %1411 = vmatprep.mubr.f32.mxu0 0.0
        %v1412 = vand.u32 %v260, 4294901760
        %v1413 = vsub.f32 %v260, %v1412
        %v1414 = vand.u32 %v1413, 4294901760
        %1415 = vmatmul.mubr.f32.gmra.mrb[0].mxu0 %v1414
        %v1416 = vpop.f32.mrb[0].mxu0
        %v1417 = vadd.f32 %v1118, %v1416
        %v1418 = vpop.f32.mrb[0].mxu0
        %1419 = vmatprep.mubr.f32.mxu0 0.0
        %v1420 = vand.u32 %v263, 4294901760
        %v1421 = vsub.f32 %v263, %v1420
        %v1422 = vand.u32 %v1421, 4294901760
        %1423 = vmatmul.mubr.f32.gmra.mrb[0].mxu0 %v1422
        %v1424 = vpop.f32.mrb[0].mxu0
        %v1425 = vadd.f32 %v1125, %v1424
        %v1426 = vpop.f32.mrb[0].mxu0
        %1427 = vmatprep.mubr.f32.mxu0 0.0
        %v1428 = vand.u32 %v266, 4294901760
        %v1429 = vsub.f32 %v266, %v1428
        %v1430 = vand.u32 %v1429, 4294901760
        %1431 = vmatmul.mubr.f32.gmra.mrb[0].mxu0 %v1430
        %v1432 = vpop.f32.mrb[0].mxu0
        %v1433 = vadd.f32 %v1132, %v1432
        %v1434 = vpop.f32.mrb[0].mxu0
        %1435 = vmatprep.mubr.f32.mxu0 0.0
        %v1436 = vand.u32 %v269, 4294901760
        %v1437 = vsub.f32 %v269, %v1436
        %v1438 = vand.u32 %v1437, 4294901760
        %1439 = vmatmul.mubr.f32.gmra.mrb[0].mxu0 %v1438
        %v1440 = vpop.f32.mrb[0].mxu0
        %v1441 = vadd.f32 %v1139, %v1440
        %v1442 = vpop.f32.mrb[0].mxu0
        %1443 = vmatprep.mubr.f32.mxu0 0.0
        %v1444 = vand.u32 %v272, 4294901760
        %v1445 = vsub.f32 %v272, %v1444
        %v1446 = vand.u32 %v1445, 4294901760
        %1447 = vmatmul.mubr.f32.gmra.mrb[0].mxu0 %v1446
        %v1448 = vpop.f32.mrb[0].mxu0
        %v1449 = vadd.f32 %v1146, %v1448
        %v1450 = vpop.f32.mrb[0].mxu0
        %1451 = vmatprep.mubr.f32.mxu0 0.0
        %v1452 = vand.u32 %v275, 4294901760
        %v1453 = vsub.f32 %v275, %v1452
        %v1454 = vand.u32 %v1453, 4294901760
        %1455 = vmatmul.mubr.f32.gmra.mrb[0].mxu0 %v1454
        %v1456 = vpop.f32.mrb[0].mxu0
        %v1457 = vadd.f32 %v1153, %v1456
        %v1458 = vpop.f32.mrb[0].mxu0
        %1459 = vmatprep.mubr.f32.mxu0 0.0
        %v1460 = vand.u32 %v278, 4294901760
        %v1461 = vsub.f32 %v278, %v1460
        %v1462 = vand.u32 %v1461, 4294901760
        %1463 = vmatmul.mubr.f32.gmra.mrb[0].mxu0 %v1462
        %v1464 = vpop.f32.mrb[0].mxu0
        %v1465 = vadd.f32 %v1160, %v1464
        %v1466 = vpop.f32.mrb[0].mxu0
        %1467 = vmatprep.mubr.f32.mxu0 0.0
        %v1468 = vand.u32 %v281, 4294901760
        %v1469 = vsub.f32 %v281, %v1468
        %v1470 = vand.u32 %v1469, 4294901760
        %1471 = vmatmul.mubr.f32.gmra.mrb[0].mxu0 %v1470
        %v1472 = vpop.f32.mrb[0].mxu0
        %v1473 = vadd.f32 %v1167, %v1472
        %v1474 = vpop.f32.mrb[0].mxu0
        %1475 = vmatprep.mubr.f32.mxu0 0.0
        %v1476 = vand.u32 %v284, 4294901760
        %v1477 = vsub.f32 %v284, %v1476
        %v1478 = vand.u32 %v1477, 4294901760
        %1479 = vmatmul.mubr.f32.gmra.mrb[0].mxu0 %v1478
        %v1480 = vpop.f32.mrb[0].mxu0
        %v1481 = vadd.f32 %v1174, %v1480
        %v1482 = vpop.f32.mrb[0].mxu0
        %1483 = vmatprep.mubr.f32.mxu0 0.0
        %v1484 = vand.u32 %v287, 4294901760
        %v1485 = vsub.f32 %v287, %v1484
        %v1486 = vand.u32 %v1485, 4294901760
        %1487 = vmatmul.mubr.f32.gmra.mrb[0].mxu0 %v1486
        %v1488 = vpop.f32.mrb[0].mxu0
        %v1489 = vadd.f32 %v1181, %v1488
        %v1490 = vpop.f32.mrb[0].mxu0
        %1491 = vmatprep.mubr.f32.mxu0 0.0
        %v1492 = vand.u32 %v290, 4294901760
        %v1493 = vsub.f32 %v290, %v1492
        %v1494 = vand.u32 %v1493, 4294901760
        %1495 = vmatmul.mubr.f32.gmra.mrb[0].mxu0 %v1494
        %v1496 = vpop.f32.mrb[0].mxu0
        %v1497 = vadd.f32 %v1188, %v1496
        %v1498 = vpop.f32.mrb[0].mxu0
        %1499 = vmatprep.mubr.f32.mxu0 0.0
        %v1500 = vand.u32 %v293, 4294901760
        %v1501 = vsub.f32 %v293, %v1500
        %v1502 = vand.u32 %v1501, 4294901760
        %1503 = vmatmul.mubr.f32.gmra.mrb[0].mxu0 %v1502
        %v1504 = vpop.f32.mrb[0].mxu0
        %v1505 = vadd.f32 %v1195, %v1504
        %v1506 = vpop.f32.mrb[0].mxu0
        %1507 = vmatprep.mubr.f32.mxu0 0.0
        %v1508 = vand.u32 %v296, 4294901760
        %v1509 = vsub.f32 %v296, %v1508
        %v1510 = vand.u32 %v1509, 4294901760
        %1511 = vmatmul.mubr.f32.gmra.mrb[0].mxu0 %v1510
        %v1512 = vpop.f32.mrb[0].mxu0
        %v1513 = vadd.f32 %v1202, %v1512
        %v1514 = vpop.f32.mrb[0].mxu0
        %1515 = vmatprep.mubr.f32.mxu0 0.0
        %v1516 = vand.u32 %v299, 4294901760
        %v1517 = vsub.f32 %v299, %v1516
        %v1518 = vand.u32 %v1517, 4294901760
        %1519 = vmatmul.mubr.f32.gmra.mrb[0].mxu0 %v1518
        %v1520 = vpop.f32.mrb[0].mxu0
        %v1521 = vadd.f32 %v1209, %v1520
        %v1522 = vpop.f32.mrb[0].mxu0
        %1523 = vmatprep.mubr.f32.mxu0 0.0
        %v1524 = vand.u32 %v302, 4294901760
        %v1525 = vsub.f32 %v302, %v1524
        %v1526 = vand.u32 %v1525, 4294901760
        %1527 = vmatmul.mubr.f32.gmra.mrb[0].mxu0 %v1526
        %v1528 = vpop.f32.mrb[0].mxu0
        %v1529 = vadd.f32 %v1216, %v1528
        %v1530 = vpop.f32.mrb[0].mxu0
        %1531 = vmatprep.mubr.f32.mxu0 0.0
        %v1532 = vand.u32 %v305, 4294901760
        %v1533 = vsub.f32 %v305, %v1532
        %v1534 = vand.u32 %v1533, 4294901760
        %1535 = vmatmul.mubr.f32.gmra.mrb[0].mxu0 %v1534
        %v1536 = vpop.f32.mrb[0].mxu0
        %v1537 = vadd.f32 %v1223, %v1536
        %v1538 = vpop.f32.mrb[0].mxu0
        %1539 = vmatprep.mubr.f32.mxu0 0.0
        %v1540 = vand.u32 %v308, 4294901760
        %v1541 = vsub.f32 %v308, %v1540
        %v1542 = vand.u32 %v1541, 4294901760
        %1543 = vmatmul.mubr.f32.gmra.mrb[0].mxu0 %v1542
        %v1544 = vpop.f32.mrb[0].mxu0
        %v1545 = vadd.f32 %v1230, %v1544
        %v1546 = vpop.f32.mrb[0].mxu0
        %1547 = vmatprep.mubr.f32.mxu0 0.0
        %v1548 = vand.u32 %v311, 4294901760
        %v1549 = vsub.f32 %v311, %v1548
        %v1550 = vand.u32 %v1549, 4294901760
        %1551 = vmatmul.mubr.f32.gmra.mrb[0].mxu0 %v1550
        %v1552 = vpop.f32.mrb[0].mxu0
        %v1553 = vadd.f32 %v1237, %v1552
        %v1554 = vpop.f32.mrb[0].mxu0
        %1555 = vmatprep.mubr.f32.mxu0 0.0
        %v1556 = vand.u32 %v314, 4294901760
        %v1557 = vsub.f32 %v314, %v1556
        %v1558 = vand.u32 %v1557, 4294901760
        %1559 = vmatmul.mubr.f32.gmra.mrb[0].mxu0 %v1558
        %v1560 = vpop.f32.mrb[0].mxu0
        %v1561 = vadd.f32 %v1244, %v1560
        %v1562 = vpop.f32.mrb[0].mxu0
        %1563 = vmatprep.mubr.f32.mxu0 0.0
        %v1564 = vand.u32 %v317, 4294901760
        %v1565 = vsub.f32 %v317, %v1564
        %v1566 = vand.u32 %v1565, 4294901760
        %1567 = vmatmul.mubr.f32.gmra.mrb[0].mxu0 %v1566
        %v1568 = vpop.f32.mrb[0].mxu0
        %v1569 = vadd.f32 %v1251, %v1568
        %v1570 = vpop.f32.mrb[0].mxu0
        %1571 = vmatprep.mubr.f32.mxu0 0.0
        %v1572 = vand.u32 %v320, 4294901760
        %v1573 = vsub.f32 %v320, %v1572
        %v1574 = vand.u32 %v1573, 4294901760
        %1575 = vmatmul.mubr.f32.gmra.mrb[0].mxu0 %v1574
        %v1576 = vpop.f32.mrb[0].mxu0
        %v1577 = vadd.f32 %v1258, %v1576
        %v1578 = vpop.f32.mrb[0].mxu0
        %1579 = vmatprep.mubr.f32.mxu0 0.0
        %v1580 = vand.u32 %v323, 4294901760
        %v1581 = vsub.f32 %v323, %v1580
        %v1582 = vand.u32 %v1581, 4294901760
        %1583 = vmatmul.mubr.f32.gmra.mrb[0].mxu0 %v1582
        %v1584 = vpop.f32.mrb[0].mxu0
        %v1585 = vadd.f32 %v1265, %v1584
        %v1586 = vpop.f32.mrb[0].mxu0
        %1587 = vmatprep.mubr.f32.mxu0 0.0
        %v1588 = vand.u32 %v326, 4294901760
        %v1589 = vsub.f32 %v326, %v1588
        %v1590 = vand.u32 %v1589, 4294901760
        %1591 = vmatmul.mubr.f32.gmra.mrb[0].mxu0 %v1590
        %v1592 = vpop.f32.mrb[0].mxu0
        %v1593 = vadd.f32 %v1272, %v1592
        %v1594 = vpop.f32.mrb[0].mxu0
        %1595 = vmatprep.mubr.f32.mxu0 0.0
        %v1596 = vand.u32 %v329, 4294901760
        %v1597 = vsub.f32 %v329, %v1596
        %v1598 = vand.u32 %v1597, 4294901760
        %1599 = vmatmul.mubr.f32.gmra.mrb[0].mxu0 %v1598
        %v1600 = vpop.f32.mrb[0].mxu0
        %v1601 = vadd.f32 %v1279, %v1600
        %v1602 = vpop.f32.mrb[0].mxu0
        %1603 = vmatprep.mubr.f32.mxu0 0.0
        %v1604 = vand.u32 %v332, 4294901760
        %v1605 = vsub.f32 %v332, %v1604
        %v1606 = vand.u32 %v1605, 4294901760
        %1607 = vmatmul.mubr.f32.gmra.mrb[0].mxu0 %v1606
        %v1608 = vpop.f32.mrb[0].mxu0
        %v1609 = vadd.f32 %v1286, %v1608
        %v1610 = vpop.f32.mrb[0].mxu0
        %1611 = vmatprep.mubr.f32.mxu0 0.0
        %v1612 = vand.u32 %v335, 4294901760
        %v1613 = vsub.f32 %v335, %v1612
        %v1614 = vand.u32 %v1613, 4294901760
        %1615 = vmatmul.mubr.f32.gmra.mrb[0].mxu0 %v1614
        %v1616 = vpop.f32.mrb[0].mxu0
        %v1617 = vadd.f32 %v1293, %v1616
        %v1618 = vpop.f32.mrb[0].mxu0
        %1619 = vmatprep.mubr.f32.mxu0 0.0
        %v1620 = vand.u32 %v338, 4294901760
        %v1621 = vsub.f32 %v338, %v1620
        %v1622 = vand.u32 %v1621, 4294901760
        %1623 = vmatmul.mubr.f32.gmra.mrb[0].mxu0 %v1622
        %v1624 = vpop.f32.mrb[0].mxu0
        %v1625 = vadd.f32 %v1300, %v1624
        %v1626 = vpop.f32.mrb[0].mxu0
        %1627 = vdwg.mxu0
        %1628 = vmatprep.subr.mxu0 0.0
        %v1629 = vand.u32 %v232, 4294901760
        %v1630 = vsub.f32 %v232, %v1629
        %v1631 = vand.u32 %v1630, 4294901760
        %1632 = vmatpush1.msra.mxu0 %v1631
        %1633 = vmatprep.subr.mxu0 0.0
        %v1634 = vand.u32 %v233, 4294901760
        %v1635 = vsub.f32 %v233, %v1634
        %v1636 = vand.u32 %v1635, 4294901760
        %1637 = vmatpush1.msra.mxu0 %v1636
        %1638 = vmatprep.subr.mxu0 0.0
        %v1639 = vand.u32 %v234, 4294901760
        %v1640 = vsub.f32 %v234, %v1639
        %v1641 = vand.u32 %v1640, 4294901760
        %1642 = vmatpush1.msra.mxu0 %v1641
        %1643 = vmatprep.subr.mxu0 0.0
        %v1644 = vand.u32 %v235, 4294901760
        %v1645 = vsub.f32 %v235, %v1644
        %v1646 = vand.u32 %v1645, 4294901760
        %1647 = vmatpush1.msra.mxu0 %v1646
        %1648 = vmatprep.subr.mxu0 0.0
        %1649 = vmatpush1.msra.mxu0 0.0
        %1650 = vmatprep.subr.mxu0 0.0
        %1651 = vmatpush1.msra.mxu0 0.0
        %1652 = vmatprep.subr.mxu0 0.0
        %1653 = vmatpush1.msra.mxu0 0.0
        %1654 = vmatprep.subr.mxu0 0.0
        %1655 = vmatpush1.msra.mxu0 0.0
        %1656 = vmatprep.subr.mxu0 0.0
        %1657 = vmatpush1.msra.mxu0 0.0
        %1658 = vmatprep.subr.mxu0 0.0
        %1659 = vmatpush1.msra.mxu0 0.0
        %1660 = vmatprep.subr.mxu0 0.0
        %1661 = vmatpush1.msra.mxu0 0.0
        %1662 = vmatprep.subr.mxu0 0.0
        %1663 = vmatpush1.msra.mxu0 0.0
        %1664 = vmatprep.subr.mxu0 0.0
        %1665 = vmatpush1.msra.mxu0 0.0
        %1666 = vmatprep.subr.mxu0 0.0
        %1667 = vmatpush1.msra.mxu0 0.0
        %1668 = vmatprep.subr.mxu0 0.0
        %1669 = vmatpush1.msra.mxu0 0.0
        %1670 = vmatprep.subr.mxu0 0.0
        %1671 = vmatpush1.msra.mxu0 0.0
        %1672 = vmatprep.subr.mxu0 0.0
        %1673 = vmatpush1.msra.mxu0 0.0
        %1674 = vmatprep.subr.mxu0 0.0
        %1675 = vmatpush1.msra.mxu0 0.0
        %1676 = vmatprep.subr.mxu0 0.0
        %1677 = vmatpush1.msra.mxu0 0.0
        %1678 = vmatprep.subr.mxu0 0.0
        %1679 = vmatpush1.msra.mxu0 0.0
        %1680 = vmatprep.subr.mxu0 0.0
        %1681 = vmatpush1.msra.mxu0 0.0
        %1682 = vmatprep.subr.mxu0 0.0
        %1683 = vmatpush1.msra.mxu0 0.0
        %1684 = vmatprep.subr.mxu0 0.0
        %1685 = vmatpush1.msra.mxu0 0.0
        %1686 = vmatprep.subr.mxu0 0.0
        %1687 = vmatpush1.msra.mxu0 0.0
        %1688 = vmatprep.subr.mxu0 0.0
        %1689 = vmatpush1.msra.mxu0 0.0
        %1690 = vmatprep.subr.mxu0 0.0
        %1691 = vmatpush1.msra.mxu0 0.0
        %1692 = vmatprep.subr.mxu0 0.0
        %1693 = vmatpush1.msra.mxu0 0.0
        %1694 = vmatprep.subr.mxu0 0.0
        %1695 = vmatpush1.msra.mxu0 0.0
        %1696 = vmatprep.subr.mxu0 0.0
        %1697 = vmatpush1.msra.mxu0 0.0
        %1698 = vmatprep.subr.mxu0 0.0
        %1699 = vmatpush1.msra.mxu0 0.0
        %1700 = vmatprep.subr.mxu0 0.0
        %1701 = vmatpush1.msra.mxu0 0.0
        %1702 = vmatprep.subr.mxu0 0.0
        %1703 = vmatpush1.msra.mxu0 0.0
        %1704 = vmatprep.mubr.f32.mxu0 0.0
        %v1705 = vand.u32 %v245, 4294901760
        %1706 = vmatmul.mubr.f32.gmra.mrb[0].mxu0 %v1705
        %v1707 = vpop.f32.mrb[0].mxu0
        %v1708 = vadd.f32 %v1377, %v1707
        %v1709 = vpop.f32.mrb[0].mxu0
        %1710 = vmatprep.mubr.f32.mxu0 0.0
        %v1711 = vand.u32 %v248, 4294901760
        %1712 = vmatmul.mubr.f32.gmra.mrb[0].mxu0 %v1711
        %v1713 = vpop.f32.mrb[0].mxu0
        %v1714 = vadd.f32 %v1385, %v1713
        %v1715 = vpop.f32.mrb[0].mxu0
        %1716 = vmatprep.mubr.f32.mxu0 0.0
        %v1717 = vand.u32 %v251, 4294901760
        %1718 = vmatmul.mubr.f32.gmra.mrb[0].mxu0 %v1717
        %v1719 = vpop.f32.mrb[0].mxu0
        %v1720 = vadd.f32 %v1393, %v1719
        %v1721 = vpop.f32.mrb[0].mxu0
        %1722 = vmatprep.mubr.f32.mxu0 0.0
        %v1723 = vand.u32 %v254, 4294901760
        %1724 = vmatmul.mubr.f32.gmra.mrb[0].mxu0 %v1723
        %v1725 = vpop.f32.mrb[0].mxu0
        %v1726 = vadd.f32 %v1401, %v1725
        %v1727 = vpop.f32.mrb[0].mxu0
        %1728 = vmatprep.mubr.f32.mxu0 0.0
        %v1729 = vand.u32 %v257, 4294901760
        %1730 = vmatmul.mubr.f32.gmra.mrb[0].mxu0 %v1729
        %v1731 = vpop.f32.mrb[0].mxu0
        %v1732 = vadd.f32 %v1409, %v1731
        %v1733 = vpop.f32.mrb[0].mxu0
        %1734 = vmatprep.mubr.f32.mxu0 0.0
        %v1735 = vand.u32 %v260, 4294901760
        %1736 = vmatmul.mubr.f32.gmra.mrb[0].mxu0 %v1735
        %v1737 = vpop.f32.mrb[0].mxu0
        %v1738 = vadd.f32 %v1417, %v1737
        %v1739 = vpop.f32.mrb[0].mxu0
        %1740 = vmatprep.mubr.f32.mxu0 0.0
        %v1741 = vand.u32 %v263, 4294901760
        %1742 = vmatmul.mubr.f32.gmra.mrb[0].mxu0 %v1741
        %v1743 = vpop.f32.mrb[0].mxu0
        %v1744 = vadd.f32 %v1425, %v1743
        %v1745 = vpop.f32.mrb[0].mxu0
        %1746 = vmatprep.mubr.f32.mxu0 0.0
        %v1747 = vand.u32 %v266, 4294901760
        %1748 = vmatmul.mubr.f32.gmra.mrb[0].mxu0 %v1747
        %v1749 = vpop.f32.mrb[0].mxu0
        %v1750 = vadd.f32 %v1433, %v1749
        %v1751 = vpop.f32.mrb[0].mxu0
        %1752 = vmatprep.mubr.f32.mxu0 0.0
        %v1753 = vand.u32 %v269, 4294901760
        %1754 = vmatmul.mubr.f32.gmra.mrb[0].mxu0 %v1753
        %v1755 = vpop.f32.mrb[0].mxu0
        %v1756 = vadd.f32 %v1441, %v1755
        %v1757 = vpop.f32.mrb[0].mxu0
        %1758 = vmatprep.mubr.f32.mxu0 0.0
        %v1759 = vand.u32 %v272, 4294901760
        %1760 = vmatmul.mubr.f32.gmra.mrb[0].mxu0 %v1759
        %v1761 = vpop.f32.mrb[0].mxu0
        %v1762 = vadd.f32 %v1449, %v1761
        %v1763 = vpop.f32.mrb[0].mxu0
        %1764 = vmatprep.mubr.f32.mxu0 0.0
        %v1765 = vand.u32 %v275, 4294901760
        %1766 = vmatmul.mubr.f32.gmra.mrb[0].mxu0 %v1765
        %v1767 = vpop.f32.mrb[0].mxu0
        %v1768 = vadd.f32 %v1457, %v1767
        %v1769 = vpop.f32.mrb[0].mxu0
        %1770 = vmatprep.mubr.f32.mxu0 0.0
        %v1771 = vand.u32 %v278, 4294901760
        %1772 = vmatmul.mubr.f32.gmra.mrb[0].mxu0 %v1771
        %v1773 = vpop.f32.mrb[0].mxu0
        %v1774 = vadd.f32 %v1465, %v1773
        %v1775 = vpop.f32.mrb[0].mxu0
        %1776 = vmatprep.mubr.f32.mxu0 0.0
        %v1777 = vand.u32 %v281, 4294901760
        %1778 = vmatmul.mubr.f32.gmra.mrb[0].mxu0 %v1777
        %v1779 = vpop.f32.mrb[0].mxu0
        %v1780 = vadd.f32 %v1473, %v1779
        %v1781 = vpop.f32.mrb[0].mxu0
        %1782 = vmatprep.mubr.f32.mxu0 0.0
        %v1783 = vand.u32 %v284, 4294901760
        %1784 = vmatmul.mubr.f32.gmra.mrb[0].mxu0 %v1783
        %v1785 = vpop.f32.mrb[0].mxu0
        %v1786 = vadd.f32 %v1481, %v1785
        %v1787 = vpop.f32.mrb[0].mxu0
        %1788 = vmatprep.mubr.f32.mxu0 0.0
        %v1789 = vand.u32 %v287, 4294901760
        %1790 = vmatmul.mubr.f32.gmra.mrb[0].mxu0 %v1789
        %v1791 = vpop.f32.mrb[0].mxu0
        %v1792 = vadd.f32 %v1489, %v1791
        %v1793 = vpop.f32.mrb[0].mxu0
        %1794 = vmatprep.mubr.f32.mxu0 0.0
        %v1795 = vand.u32 %v290, 4294901760
        %1796 = vmatmul.mubr.f32.gmra.mrb[0].mxu0 %v1795
        %v1797 = vpop.f32.mrb[0].mxu0
        %v1798 = vadd.f32 %v1497, %v1797
        %v1799 = vpop.f32.mrb[0].mxu0
        %1800 = vmatprep.mubr.f32.mxu0 0.0
        %v1801 = vand.u32 %v293, 4294901760
        %1802 = vmatmul.mubr.f32.gmra.mrb[0].mxu0 %v1801
        %v1803 = vpop.f32.mrb[0].mxu0
        %v1804 = vadd.f32 %v1505, %v1803
        %v1805 = vpop.f32.mrb[0].mxu0
        %1806 = vmatprep.mubr.f32.mxu0 0.0
        %v1807 = vand.u32 %v296, 4294901760
        %1808 = vmatmul.mubr.f32.gmra.mrb[0].mxu0 %v1807
        %v1809 = vpop.f32.mrb[0].mxu0
        %v1810 = vadd.f32 %v1513, %v1809
        %v1811 = vpop.f32.mrb[0].mxu0
        %1812 = vmatprep.mubr.f32.mxu0 0.0
        %v1813 = vand.u32 %v299, 4294901760
        %1814 = vmatmul.mubr.f32.gmra.mrb[0].mxu0 %v1813
        %v1815 = vpop.f32.mrb[0].mxu0
        %v1816 = vadd.f32 %v1521, %v1815
        %v1817 = vpop.f32.mrb[0].mxu0
        %1818 = vmatprep.mubr.f32.mxu0 0.0
        %v1819 = vand.u32 %v302, 4294901760
        %1820 = vmatmul.mubr.f32.gmra.mrb[0].mxu0 %v1819
        %v1821 = vpop.f32.mrb[0].mxu0
        %v1822 = vadd.f32 %v1529, %v1821
        %v1823 = vpop.f32.mrb[0].mxu0
        %1824 = vmatprep.mubr.f32.mxu0 0.0
        %v1825 = vand.u32 %v305, 4294901760
        %1826 = vmatmul.mubr.f32.gmra.mrb[0].mxu0 %v1825
        %v1827 = vpop.f32.mrb[0].mxu0
        %v1828 = vadd.f32 %v1537, %v1827
        %v1829 = vpop.f32.mrb[0].mxu0
        %1830 = vmatprep.mubr.f32.mxu0 0.0
        %v1831 = vand.u32 %v308, 4294901760
        %1832 = vmatmul.mubr.f32.gmra.mrb[0].mxu0 %v1831
        %v1833 = vpop.f32.mrb[0].mxu0
        %v1834 = vadd.f32 %v1545, %v1833
        %v1835 = vpop.f32.mrb[0].mxu0
        %1836 = vmatprep.mubr.f32.mxu0 0.0
        %v1837 = vand.u32 %v311, 4294901760
        %1838 = vmatmul.mubr.f32.gmra.mrb[0].mxu0 %v1837
        %v1839 = vpop.f32.mrb[0].mxu0
        %v1840 = vadd.f32 %v1553, %v1839
        %v1841 = vpop.f32.mrb[0].mxu0
        %1842 = vmatprep.mubr.f32.mxu0 0.0
        %v1843 = vand.u32 %v314, 4294901760
        %1844 = vmatmul.mubr.f32.gmra.mrb[0].mxu0 %v1843
        %v1845 = vpop.f32.mrb[0].mxu0
        %v1846 = vadd.f32 %v1561, %v1845
        %v1847 = vpop.f32.mrb[0].mxu0
        %1848 = vmatprep.mubr.f32.mxu0 0.0
        %v1849 = vand.u32 %v317, 4294901760
        %1850 = vmatmul.mubr.f32.gmra.mrb[0].mxu0 %v1849
        %v1851 = vpop.f32.mrb[0].mxu0
        %v1852 = vadd.f32 %v1569, %v1851
        %v1853 = vpop.f32.mrb[0].mxu0
        %1854 = vmatprep.mubr.f32.mxu0 0.0
        %v1855 = vand.u32 %v320, 4294901760
        %1856 = vmatmul.mubr.f32.gmra.mrb[0].mxu0 %v1855
        %v1857 = vpop.f32.mrb[0].mxu0
        %v1858 = vadd.f32 %v1577, %v1857
        %v1859 = vpop.f32.mrb[0].mxu0
        %1860 = vmatprep.mubr.f32.mxu0 0.0
        %v1861 = vand.u32 %v323, 4294901760
        %1862 = vmatmul.mubr.f32.gmra.mrb[0].mxu0 %v1861
        %v1863 = vpop.f32.mrb[0].mxu0
        %v1864 = vadd.f32 %v1585, %v1863
        %v1865 = vpop.f32.mrb[0].mxu0
        %1866 = vmatprep.mubr.f32.mxu0 0.0
        %v1867 = vand.u32 %v326, 4294901760
        %1868 = vmatmul.mubr.f32.gmra.mrb[0].mxu0 %v1867
        %v1869 = vpop.f32.mrb[0].mxu0
        %v1870 = vadd.f32 %v1593, %v1869
        %v1871 = vpop.f32.mrb[0].mxu0
        %1872 = vmatprep.mubr.f32.mxu0 0.0
        %v1873 = vand.u32 %v329, 4294901760
        %1874 = vmatmul.mubr.f32.gmra.mrb[0].mxu0 %v1873
        %v1875 = vpop.f32.mrb[0].mxu0
        %v1876 = vadd.f32 %v1601, %v1875
        %v1877 = vpop.f32.mrb[0].mxu0
        %1878 = vmatprep.mubr.f32.mxu0 0.0
        %v1879 = vand.u32 %v332, 4294901760
        %1880 = vmatmul.mubr.f32.gmra.mrb[0].mxu0 %v1879
        %v1881 = vpop.f32.mrb[0].mxu0
        %v1882 = vadd.f32 %v1609, %v1881
        %v1883 = vpop.f32.mrb[0].mxu0
        %1884 = vmatprep.mubr.f32.mxu0 0.0
        %v1885 = vand.u32 %v335, 4294901760
        %1886 = vmatmul.mubr.f32.gmra.mrb[0].mxu0 %v1885
        %v1887 = vpop.f32.mrb[0].mxu0
        %v1888 = vadd.f32 %v1617, %v1887
        %v1889 = vpop.f32.mrb[0].mxu0
        %1890 = vmatprep.mubr.f32.mxu0 0.0
        %v1891 = vand.u32 %v338, 4294901760
        %1892 = vmatmul.mubr.f32.gmra.mrb[0].mxu0 %v1891
        %v1893 = vpop.f32.mrb[0].mxu0
        %v1894 = vadd.f32 %v1625, %v1893
        %v1895 = vpop.f32.mrb[0].mxu0
        %1896 = vdwg.mxu0
        %1897 = vmatprep.subr.mxu0 0.0
        %v1898 = vand.u32 %v232, 4294901760
        %1899 = vmatpush1.msra.mxu0 %v1898
        %1900 = vmatprep.subr.mxu0 0.0
        %v1901 = vand.u32 %v233, 4294901760
        %1902 = vmatpush1.msra.mxu0 %v1901
        %1903 = vmatprep.subr.mxu0 0.0
        %v1904 = vand.u32 %v234, 4294901760
        %1905 = vmatpush1.msra.mxu0 %v1904
        %1906 = vmatprep.subr.mxu0 0.0
        %v1907 = vand.u32 %v235, 4294901760
        %1908 = vmatpush1.msra.mxu0 %v1907
        %1909 = vmatprep.subr.mxu0 0.0
        %1910 = vmatpush1.msra.mxu0 0.0
        %1911 = vmatprep.subr.mxu0 0.0
        %1912 = vmatpush1.msra.mxu0 0.0
        %1913 = vmatprep.subr.mxu0 0.0
        %1914 = vmatpush1.msra.mxu0 0.0
        %1915 = vmatprep.subr.mxu0 0.0
        %1916 = vmatpush1.msra.mxu0 0.0
        %1917 = vmatprep.subr.mxu0 0.0
        %1918 = vmatpush1.msra.mxu0 0.0
        %1919 = vmatprep.subr.mxu0 0.0
        %1920 = vmatpush1.msra.mxu0 0.0
        %1921 = vmatprep.subr.mxu0 0.0
        %1922 = vmatpush1.msra.mxu0 0.0
        %1923 = vmatprep.subr.mxu0 0.0
        %1924 = vmatpush1.msra.mxu0 0.0
        %1925 = vmatprep.subr.mxu0 0.0
        %1926 = vmatpush1.msra.mxu0 0.0
        %1927 = vmatprep.subr.mxu0 0.0
        %1928 = vmatpush1.msra.mxu0 0.0
        %1929 = vmatprep.subr.mxu0 0.0
        %1930 = vmatpush1.msra.mxu0 0.0
        %1931 = vmatprep.subr.mxu0 0.0
        %1932 = vmatpush1.msra.mxu0 0.0
        %1933 = vmatprep.subr.mxu0 0.0
        %1934 = vmatpush1.msra.mxu0 0.0
        %1935 = vmatprep.subr.mxu0 0.0
        %1936 = vmatpush1.msra.mxu0 0.0
        %1937 = vmatprep.subr.mxu0 0.0
        %1938 = vmatpush1.msra.mxu0 0.0
        %1939 = vmatprep.subr.mxu0 0.0
        %1940 = vmatpush1.msra.mxu0 0.0
        %1941 = vmatprep.subr.mxu0 0.0
        %1942 = vmatpush1.msra.mxu0 0.0
        %1943 = vmatprep.subr.mxu0 0.0
        %1944 = vmatpush1.msra.mxu0 0.0
        %1945 = vmatprep.subr.mxu0 0.0
        %1946 = vmatpush1.msra.mxu0 0.0
        %1947 = vmatprep.subr.mxu0 0.0
        %1948 = vmatpush1.msra.mxu0 0.0
        %1949 = vmatprep.subr.mxu0 0.0
        %1950 = vmatpush1.msra.mxu0 0.0
        %1951 = vmatprep.subr.mxu0 0.0
        %1952 = vmatpush1.msra.mxu0 0.0
        %1953 = vmatprep.subr.mxu0 0.0
        %1954 = vmatpush1.msra.mxu0 0.0
        %1955 = vmatprep.subr.mxu0 0.0
        %1956 = vmatpush1.msra.mxu0 0.0
        %1957 = vmatprep.subr.mxu0 0.0
        %1958 = vmatpush1.msra.mxu0 0.0
        %1959 = vmatprep.subr.mxu0 0.0
        %1960 = vmatpush1.msra.mxu0 0.0
        %1961 = vmatprep.subr.mxu0 0.0
        %1962 = vmatpush1.msra.mxu0 0.0
        %1963 = vmatprep.subr.mxu0 0.0
        %1964 = vmatpush1.msra.mxu0 0.0
        %1965 = vmatprep.mubr.f32.mxu0 0.0
        %v1966 = vand.u32 %v245, 4294901760
        %1967 = vmatmul.mubr.f32.gmra.mrb[0].mxu0 %v1966
        %v1968 = vpop.f32.mrb[0].mxu0
        %v1969 = vadd.f32 %v1708, %v1968
        %v1970 = vpop.f32.mrb[0].mxu0
        %1971 = vmatprep.mubr.f32.mxu0 0.0
        %v1972 = vand.u32 %v248, 4294901760
        %1973 = vmatmul.mubr.f32.gmra.mrb[0].mxu0 %v1972
        %v1974 = vpop.f32.mrb[0].mxu0
        %v1975 = vadd.f32 %v1714, %v1974
        %v1976 = vpop.f32.mrb[0].mxu0
        %1977 = vmatprep.mubr.f32.mxu0 0.0
        %v1978 = vand.u32 %v251, 4294901760
        %1979 = vmatmul.mubr.f32.gmra.mrb[0].mxu0 %v1978
        %v1980 = vpop.f32.mrb[0].mxu0
        %v1981 = vadd.f32 %v1720, %v1980
        %v1982 = vpop.f32.mrb[0].mxu0
        %1983 = vmatprep.mubr.f32.mxu0 0.0
        %v1984 = vand.u32 %v254, 4294901760
        %1985 = vmatmul.mubr.f32.gmra.mrb[0].mxu0 %v1984
        %v1986 = vpop.f32.mrb[0].mxu0
        %v1987 = vadd.f32 %v1726, %v1986
        %v1988 = vpop.f32.mrb[0].mxu0
        %1989 = vmatprep.mubr.f32.mxu0 0.0
        %v1990 = vand.u32 %v257, 4294901760
        %1991 = vmatmul.mubr.f32.gmra.mrb[0].mxu0 %v1990
        %v1992 = vpop.f32.mrb[0].mxu0
        %v1993 = vadd.f32 %v1732, %v1992
        %v1994 = vpop.f32.mrb[0].mxu0
        %1995 = vmatprep.mubr.f32.mxu0 0.0
        %v1996 = vand.u32 %v260, 4294901760
        %1997 = vmatmul.mubr.f32.gmra.mrb[0].mxu0 %v1996
        %v1998 = vpop.f32.mrb[0].mxu0
        %v1999 = vadd.f32 %v1738, %v1998
        %v2000 = vpop.f32.mrb[0].mxu0
        %2001 = vmatprep.mubr.f32.mxu0 0.0
        %v2002 = vand.u32 %v263, 4294901760
        %2003 = vmatmul.mubr.f32.gmra.mrb[0].mxu0 %v2002
        %v2004 = vpop.f32.mrb[0].mxu0
        %v2005 = vadd.f32 %v1744, %v2004
        %v2006 = vpop.f32.mrb[0].mxu0
        %2007 = vmatprep.mubr.f32.mxu0 0.0
        %v2008 = vand.u32 %v266, 4294901760
        %2009 = vmatmul.mubr.f32.gmra.mrb[0].mxu0 %v2008
        %v2010 = vpop.f32.mrb[0].mxu0
        %v2011 = vadd.f32 %v1750, %v2010
        %v2012 = vpop.f32.mrb[0].mxu0
        %2013 = vmatprep.mubr.f32.mxu0 0.0
        %v2014 = vand.u32 %v269, 4294901760
        %2015 = vmatmul.mubr.f32.gmra.mrb[0].mxu0 %v2014
        %v2016 = vpop.f32.mrb[0].mxu0
        %v2017 = vadd.f32 %v1756, %v2016
        %v2018 = vpop.f32.mrb[0].mxu0
        %2019 = vmatprep.mubr.f32.mxu0 0.0
        %v2020 = vand.u32 %v272, 4294901760
        %2021 = vmatmul.mubr.f32.gmra.mrb[0].mxu0 %v2020
        %v2022 = vpop.f32.mrb[0].mxu0
        %v2023 = vadd.f32 %v1762, %v2022
        %v2024 = vpop.f32.mrb[0].mxu0
        %2025 = vmatprep.mubr.f32.mxu0 0.0
        %v2026 = vand.u32 %v275, 4294901760
        %2027 = vmatmul.mubr.f32.gmra.mrb[0].mxu0 %v2026
        %v2028 = vpop.f32.mrb[0].mxu0
        %v2029 = vadd.f32 %v1768, %v2028
        %v2030 = vpop.f32.mrb[0].mxu0
        %2031 = vmatprep.mubr.f32.mxu0 0.0
        %v2032 = vand.u32 %v278, 4294901760
        %2033 = vmatmul.mubr.f32.gmra.mrb[0].mxu0 %v2032
        %v2034 = vpop.f32.mrb[0].mxu0
        %v2035 = vadd.f32 %v1774, %v2034
        %v2036 = vpop.f32.mrb[0].mxu0
        %2037 = vmatprep.mubr.f32.mxu0 0.0
        %v2038 = vand.u32 %v281, 4294901760
        %2039 = vmatmul.mubr.f32.gmra.mrb[0].mxu0 %v2038
        %v2040 = vpop.f32.mrb[0].mxu0
        %v2041 = vadd.f32 %v1780, %v2040
        %v2042 = vpop.f32.mrb[0].mxu0
        %2043 = vmatprep.mubr.f32.mxu0 0.0
        %v2044 = vand.u32 %v284, 4294901760
        %2045 = vmatmul.mubr.f32.gmra.mrb[0].mxu0 %v2044
        %v2046 = vpop.f32.mrb[0].mxu0
        %v2047 = vadd.f32 %v1786, %v2046
        %v2048 = vpop.f32.mrb[0].mxu0
        %2049 = vmatprep.mubr.f32.mxu0 0.0
        %v2050 = vand.u32 %v287, 4294901760
        %2051 = vmatmul.mubr.f32.gmra.mrb[0].mxu0 %v2050
        %v2052 = vpop.f32.mrb[0].mxu0
        %v2053 = vadd.f32 %v1792, %v2052
        %v2054 = vpop.f32.mrb[0].mxu0
        %2055 = vmatprep.mubr.f32.mxu0 0.0
        %v2056 = vand.u32 %v290, 4294901760
        %2057 = vmatmul.mubr.f32.gmra.mrb[0].mxu0 %v2056
        %v2058 = vpop.f32.mrb[0].mxu0
        %v2059 = vadd.f32 %v1798, %v2058
        %v2060 = vpop.f32.mrb[0].mxu0
        %2061 = vmatprep.mubr.f32.mxu0 0.0
        %v2062 = vand.u32 %v293, 4294901760
        %2063 = vmatmul.mubr.f32.gmra.mrb[0].mxu0 %v2062
        %v2064 = vpop.f32.mrb[0].mxu0
        %v2065 = vadd.f32 %v1804, %v2064
        %v2066 = vpop.f32.mrb[0].mxu0
        %2067 = vmatprep.mubr.f32.mxu0 0.0
        %v2068 = vand.u32 %v296, 4294901760
        %2069 = vmatmul.mubr.f32.gmra.mrb[0].mxu0 %v2068
        %v2070 = vpop.f32.mrb[0].mxu0
        %v2071 = vadd.f32 %v1810, %v2070
        %v2072 = vpop.f32.mrb[0].mxu0
        %2073 = vmatprep.mubr.f32.mxu0 0.0
        %v2074 = vand.u32 %v299, 4294901760
        %2075 = vmatmul.mubr.f32.gmra.mrb[0].mxu0 %v2074
        %v2076 = vpop.f32.mrb[0].mxu0
        %v2077 = vadd.f32 %v1816, %v2076
        %v2078 = vpop.f32.mrb[0].mxu0
        %2079 = vmatprep.mubr.f32.mxu0 0.0
        %v2080 = vand.u32 %v302, 4294901760
        %2081 = vmatmul.mubr.f32.gmra.mrb[0].mxu0 %v2080
        %v2082 = vpop.f32.mrb[0].mxu0
        %v2083 = vadd.f32 %v1822, %v2082
        %v2084 = vpop.f32.mrb[0].mxu0
        %2085 = vmatprep.mubr.f32.mxu0 0.0
        %v2086 = vand.u32 %v305, 4294901760
        %2087 = vmatmul.mubr.f32.gmra.mrb[0].mxu0 %v2086
        %v2088 = vpop.f32.mrb[0].mxu0
        %v2089 = vadd.f32 %v1828, %v2088
        %v2090 = vpop.f32.mrb[0].mxu0
        %2091 = vmatprep.mubr.f32.mxu0 0.0
        %v2092 = vand.u32 %v308, 4294901760
        %2093 = vmatmul.mubr.f32.gmra.mrb[0].mxu0 %v2092
        %v2094 = vpop.f32.mrb[0].mxu0
        %v2095 = vadd.f32 %v1834, %v2094
        %v2096 = vpop.f32.mrb[0].mxu0
        %2097 = vmatprep.mubr.f32.mxu0 0.0
        %v2098 = vand.u32 %v311, 4294901760
        %2099 = vmatmul.mubr.f32.gmra.mrb[0].mxu0 %v2098
        %v2100 = vpop.f32.mrb[0].mxu0
        %v2101 = vadd.f32 %v1840, %v2100
        %v2102 = vpop.f32.mrb[0].mxu0
        %2103 = vmatprep.mubr.f32.mxu0 0.0
        %v2104 = vand.u32 %v314, 4294901760
        %2105 = vmatmul.mubr.f32.gmra.mrb[0].mxu0 %v2104
        %v2106 = vpop.f32.mrb[0].mxu0
        %v2107 = vadd.f32 %v1846, %v2106
        %v2108 = vpop.f32.mrb[0].mxu0
        %2109 = vmatprep.mubr.f32.mxu0 0.0
        %v2110 = vand.u32 %v317, 4294901760
        %2111 = vmatmul.mubr.f32.gmra.mrb[0].mxu0 %v2110
        %v2112 = vpop.f32.mrb[0].mxu0
        %v2113 = vadd.f32 %v1852, %v2112
        %v2114 = vpop.f32.mrb[0].mxu0
        %2115 = vmatprep.mubr.f32.mxu0 0.0
        %v2116 = vand.u32 %v320, 4294901760
        %2117 = vmatmul.mubr.f32.gmra.mrb[0].mxu0 %v2116
        %v2118 = vpop.f32.mrb[0].mxu0
        %v2119 = vadd.f32 %v1858, %v2118
        %v2120 = vpop.f32.mrb[0].mxu0
        %2121 = vmatprep.mubr.f32.mxu0 0.0
        %v2122 = vand.u32 %v323, 4294901760
        %2123 = vmatmul.mubr.f32.gmra.mrb[0].mxu0 %v2122
        %v2124 = vpop.f32.mrb[0].mxu0
        %v2125 = vadd.f32 %v1864, %v2124
        %v2126 = vpop.f32.mrb[0].mxu0
        %2127 = vmatprep.mubr.f32.mxu0 0.0
        %v2128 = vand.u32 %v326, 4294901760
        %2129 = vmatmul.mubr.f32.gmra.mrb[0].mxu0 %v2128
        %v2130 = vpop.f32.mrb[0].mxu0
        %v2131 = vadd.f32 %v1870, %v2130
        %v2132 = vpop.f32.mrb[0].mxu0
        %2133 = vmatprep.mubr.f32.mxu0 0.0
        %v2134 = vand.u32 %v329, 4294901760
        %2135 = vmatmul.mubr.f32.gmra.mrb[0].mxu0 %v2134
        %v2136 = vpop.f32.mrb[0].mxu0
        %v2137 = vadd.f32 %v1876, %v2136
        %v2138 = vpop.f32.mrb[0].mxu0
        %2139 = vmatprep.mubr.f32.mxu0 0.0
        %v2140 = vand.u32 %v332, 4294901760
        %2141 = vmatmul.mubr.f32.gmra.mrb[0].mxu0 %v2140
        %v2142 = vpop.f32.mrb[0].mxu0
        %v2143 = vadd.f32 %v1882, %v2142
        %v2144 = vpop.f32.mrb[0].mxu0
        %2145 = vmatprep.mubr.f32.mxu0 0.0
        %v2146 = vand.u32 %v335, 4294901760
        %2147 = vmatmul.mubr.f32.gmra.mrb[0].mxu0 %v2146
        %v2148 = vpop.f32.mrb[0].mxu0
        %v2149 = vadd.f32 %v1888, %v2148
        %v2150 = vpop.f32.mrb[0].mxu0
        %2151 = vmatprep.mubr.f32.mxu0 0.0
        %v2152 = vand.u32 %v338, 4294901760
        %2153 = vmatmul.mubr.f32.gmra.mrb[0].mxu0 %v2152
        %v2154 = vpop.f32.mrb[0].mxu0
        %v2155 = vadd.f32 %v1894, %v2154
        %v2156 = vpop.f32.mrb[0].mxu0
        %2157 = vdwg.mxu0
        %2158 = vst [vmem:[%s188] sm:$0xff] %v1969
        %2159 = vst [vmem:[%s188 + $0x8] sm:$0xff] %v1975
        %2160 = vst [vmem:[%s188 + $0x10] sm:$0xff] %v1981
        %2161 = vst [vmem:[%s188 + $0x18] sm:$0xff] %v1987
        %2162 = vst [vmem:[%s188 + $0x20] sm:$0xff] %v1993
        %2163 = vst [vmem:[%s188 + $0x28] sm:$0xff] %v1999
        %2164 = vst [vmem:[%s188 + $0x30] sm:$0xff] %v2005
        %2165 = vst [vmem:[%s188 + $0x38] sm:$0xff] %v2011
        %2166 = vst [vmem:[%s188 + $0x40] sm:$0xff] %v2017
        %2167 = vst [vmem:[%s188 + $0x48] sm:$0xff] %v2023
        %2168 = vst [vmem:[%s188 + $0x50] sm:$0xff] %v2029
        %2169 = vst [vmem:[%s188 + $0x58] sm:$0xff] %v2035
        %2170 = vst [vmem:[%s188 + $0x60] sm:$0xff] %v2041
        %2171 = vst [vmem:[%s188 + $0x68] sm:$0xff] %v2047
        %2172 = vst [vmem:[%s188 + $0x70] sm:$0xff] %v2053
        %2173 = vst [vmem:[%s188 + $0x78] sm:$0xff] %v2059
        %2174 = vst [vmem:[%s188 + $0x80] sm:$0xff] %v2065
        %2175 = vst [vmem:[%s188 + $0x88] sm:$0xff] %v2071
        %2176 = vst [vmem:[%s188 + $0x90] sm:$0xff] %v2077
        %2177 = vst [vmem:[%s188 + $0x98] sm:$0xff] %v2083
        %2178 = vst [vmem:[%s188 + $0xa0] sm:$0xff] %v2089
        %2179 = vst [vmem:[%s188 + $0xa8] sm:$0xff] %v2095
        %2180 = vst [vmem:[%s188 + $0xb0] sm:$0xff] %v2101
        %2181 = vst [vmem:[%s188 + $0xb8] sm:$0xff] %v2107
        %2182 = vst [vmem:[%s188 + $0xc0] sm:$0xff] %v2113
        %2183 = vst [vmem:[%s188 + $0xc8] sm:$0xff] %v2119
        %2184 = vst [vmem:[%s188 + $0xd0] sm:$0xff] %v2125
        %2185 = vst [vmem:[%s188 + $0xd8] sm:$0xff] %v2131
        %2186 = vst [vmem:[%s188 + $0xe0] sm:$0xff] %v2137
        %2187 = vst [vmem:[%s188 + $0xe8] sm:$0xff] %v2143
        %2188 = vst [vmem:[%s188 + $0xf0] sm:$0xff] %v2149
        %2189 = vst [vmem:[%s188 + $0xf8] sm:$0xff] %v2155
        %s2190 = sand.u32 %s109, 1
        %s2191 = scalar_lea.sflag [#allocation3], %s2190
        %s2192 = sand.u32 %s109, 1
        %s2193 = smul.addr %s2192, 256
        %s2194 = scalar_lea.vmem [#allocation2], %s2193
        // Predicated region
        $region33: #{tpu_custom_call.1} parent=31 // pred_check
          %p2195 = pneg %p119
        $region34: #{tpu_custom_call.1} parent=31 // pred_check_branch
          %2197 = sbr.rel (%p2195) target = $region36
        $region35: #{tpu_custom_call.1} parent=31 // pred_region
          %s2198 = smul.u32 32, %s22
          %s2200 = ssub.s32 4096, 4096
          %2201 = vsyncadd %s2191, %s2200
          %s2202 = smul.addr %s21, 32
          %s2203 = sadd.s32 %s2198, %s2202
          %s2204 = smul.addr %s2203, 128
          %s2205 = scalar_lea.hbm %s3, %s2204
          %s2206 = sshll.u32 %s2194, 4
          %s2207 = int_to_ptr.vmem [resolvable:$true] %s2206
          %2212 = dma.vmem_to_hbm [thread:$0]  %s2207, 4096, %s2205, %s2191, 128, 128, 8
        $region36: #{tpu_custom_call.1} parent=31 // pred_fallthru
          _
      $region32: #{tpu_custom_call.1} parent=5 // pred_fallthru
        _
      %p2213 = scmp.le.s32.totalorder 2, %s12
      // Predicated region
      $region37: #{tpu_custom_call.1} parent=5 // pred_check
        %p2214 = pneg %p2213
      $region38: #{tpu_custom_call.1} parent=5 // pred_check_branch
        %2216 = sbr.rel (%p2214) target = $region40
      $region39: #{tpu_custom_call.1} parent=5 // pred_region
        %s2217 = ssub.s32 %s12, 2
        // Predicated region
        $region41: #{tpu_custom_call.1} parent=39 // pred_check
          %p2218 = pneg %p125
        $region42: #{tpu_custom_call.1} parent=39 // pred_check_branch
          %2220 = sbr.rel (%p2218) target = $region44
        $region43: #{tpu_custom_call.1} parent=39 // pred_region
          %s2221 = sand.u32 %s110, 1
          %s2222 = scalar_lea.sflag [#allocation3], %s2221
          %s2223 = sand.u32 %s110, 1
          %s2224 = smul.addr %s2223, 256
          %s2225 = scalar_lea.vmem [#allocation2], %s2224
          %2226 = dma.done %s2222, 4096
        $region44: #{tpu_custom_call.1} parent=39 // pred_fallthru
          _
      $region40: #{tpu_custom_call.1} parent=5 // pred_fallthru
        _
    $region6: #{tpu_custom_call.1} parent=1 // loop_footer
      %s16 = sadd.s32 1, %s12
    $region7: #{tpu_custom_call.1} parent=1 // loop_footer_branch
      %11 = sbr.rel target = $region3
    $region8: #{tpu_custom_call.1} parent=1 // loop_exit
      _
    %2227 = vsyncpa [#allocation3], 1
    %s2228 = scalar_lea.sflag [#allocation3], 1
    %2229 = vsyncpa %s2228, 1

</llo_original>
